<compile_context>
chip_gen: v7x
topology: tpu7x:2x2x1
jax: 0.10.0
libtpu: 0.0.40
codegen_flags: <defaults>
</compile_context>

<pallas_src>
import jax
import jax.numpy as jnp
from jax import lax
from jax.experimental import pallas as pl
from jax.experimental.pallas import tpu as pltpu

LATENT_DIM = 100
LATENT_PAD = 128          # zero-padded K for the first matmul (lane aligned)
OUT_LANE_PAD = 128        # lane-dense final output width (sliced to action_dim)
BN_EPS = 0.8              # BatchNorm1d(out_feat, 0.8): second positional arg is eps
LEAKY_SLOPE = 0.2


def _param_offsets():
    """Static layout of the packed [1, PVEC_LEN] small-parameter vector."""
    layout = [
        ("b1", 128),
        ("b2", 256), ("g2", 256), ("be2", 256),
        ("b3", 512), ("g3", 512), ("be3", 512),
        ("b4", 1024), ("g4", 1024), ("be4", 1024),
        ("b5", OUT_LANE_PAD), ("scale", OUT_LANE_PAD),
    ]
    offs, o = {}, 0
    for name, n in layout:
        offs[name] = (o, n)
        o += n
    return offs, o


PVEC_OFFS, PVEC_LEN = _param_offsets()   # all offsets are multiples of 128


def _make_generator_kernel(valid_batch, padded_batch):
    """Kernel factory; batch sizes are compile-time constants (closure)."""
    inv_b = 1.0 / float(valid_batch)
    need_mask = valid_batch != padded_batch

    def kernel(z_ref,
               w1_ref, w2_ref, w3_ref,
               w4_hbm, w5_hbm,
               pvec_ref,
               out_ref,
               zbuf, w4_buf, w5_buf, dma_sem):

        # Kick off the big weight fetches immediately; they complete behind
        # the layer-1..3 matmuls and BN math.
        cp4 = pltpu.make_async_copy(w4_hbm, w4_buf, dma_sem.at[0])
        cp5 = pltpu.make_async_copy(w5_hbm, w5_buf, dma_sem.at[1])
        cp4.start()
        cp5.start()

        def pget(name):
            off, n = PVEC_OFFS[name]
            return pvec_ref[:, off:off + n]          # static, lane-aligned slice

        def linear(h_lo, w, b):
            # bf16 x bf16 on the MXU, f32 accumulation, f32 bias add.
            return jnp.dot(h_lo, w, preferred_element_type=jnp.float32) + b

        def leaky(h):
            return jnp.maximum(h, jnp.float32(LEAKY_SLOPE) * h)

        if need_mask:
            rows = lax.broadcasted_iota(jnp.int32, (padded_batch, 1), 0)
            row_mask = (rows < valid_batch).astype(jnp.float32)
        else:
            row_mask = None

        def bn_leaky(h, g, be):
            # Train-mode BatchNorm1d: one-pass batch stats (f32, biased var),
            # folded into a single FMA per element. Padded rows masked out of
            # the statistics so they stay exact over the valid batch.
            hm = h if row_mask is None else h * row_mask
            s1 = jnp.sum(hm, axis=0, keepdims=True)
            s2 = jnp.sum(hm * hm, axis=0, keepdims=True)
            mu = s1 * inv_b
            var = jnp.maximum(s2 * inv_b - mu * mu, jnp.float32(0.0))
            a = g * lax.rsqrt(var + jnp.float32(BN_EPS))
            b = be - mu * a
            return leaky(h * a + b)

        # Stage z fully in-kernel: zero-pad batch -> padded_batch and latent
        # 100 -> 128 lanes, then cast to bf16 for the MXU.
        zbuf[...] = jnp.zeros_like(zbuf)
        zbuf[0:valid_batch, 0:LATENT_DIM] = z_ref[...]
        x = zbuf[...].astype(jnp.bfloat16)

        h = leaky(linear(x, w1_ref[...], pget("b1"))).astype(jnp.bfloat16)
        h = bn_leaky(linear(h, w2_ref[...], pget("b2")),
                     pget("g2"), pget("be2")).astype(jnp.bfloat16)
        h = bn_leaky(linear(h, w3_ref[...], pget("b3")),
                     pget("g3"), pget("be3")).astype(jnp.bfloat16)

        cp4.wait()
        h = bn_leaky(linear(h, w4_buf[...], pget("b4")),
                     pget("g4"), pget("be4")).astype(jnp.bfloat16)

        cp5.wait()
        act = jnp.tanh(linear(h, w5_buf[...], pget("b5")))      # f32 [Bp,128]
        out_ref[...] = pget("scale") * act                      # lane-dense store

    return kernel


def generator_forward(z, weights, action_dim):
    """z: [B, LATENT_DIM] float32. weights: tuple from init_params()[0]."""
    w1, w2, w3, w4, w5, pvec = weights
    batch = z.shape[0]
    padded_batch = batch + (-batch % 16)            # bf16 sublane tile = 16 rows

    # Scoped VMEM: ~1.7 MiB resident weights/scratch + ~32 KiB per padded row,
    # generous headroom; capped well under v7x's 64 MiB physical VMEM.
    vmem_limit = min(48 << 20, (8 << 20) + padded_batch * (32 << 10))

    vmem = pl.BlockSpec(memory_space=pltpu.MemorySpace.VMEM)
    hbm = pl.BlockSpec(memory_space=pl.ANY)

    out = pl.pallas_call(
        _make_generator_kernel(batch, padded_batch),
        out_shape=jax.ShapeDtypeStruct((padded_batch, OUT_LANE_PAD), jnp.float32),
        in_specs=[vmem, vmem, vmem, vmem, hbm, hbm, vmem],
        out_specs=vmem,
        scratch_shapes=[
            pltpu.VMEM((padded_batch, LATENT_PAD), jnp.float32),   # z staging
            pltpu.VMEM((512, 1024), jnp.bfloat16),                 # w4 buffer
            pltpu.VMEM((1024, OUT_LANE_PAD), jnp.bfloat16),        # w5 buffer
            pltpu.SemaphoreType.DMA((2,)),
        ],
        compiler_params=pltpu.CompilerParams(vmem_limit_bytes=vmem_limit),
    )(z, w1, w2, w3, w4, w5, pvec)
    return out[:batch, :action_dim]


def init_params(key, action_dim, scale_vec):
    """Kernel-ready params matching the PyTorch module's parameter shapes.

    Linear weights: bf16, transposed to [in, out]; w1 zero-padded to 128 input
    rows, w5 zero-padded to 128 output lanes. All small [1, N] f32 params
    (biases, BN gamma/beta, scale) are packed into one [1, PVEC_LEN] vector.
    Returns (kernel_inputs, small_param_dict_for_reference).
    """
    dims = [(LATENT_DIM, 128), (128, 256), (256, 512), (512, 1024), (1024, action_dim)]
    ws = []
    small = {}
    for idx, (fin, fout) in enumerate(dims):
        key, kw, kb = jax.random.split(key, 3)
        bound = 1.0 / (fin ** 0.5)
        w = jax.random.uniform(kw, (fin, fout), jnp.float32, -bound, bound)
        b = jax.random.uniform(kb, (1, fout), jnp.float32, -bound, bound)
        if idx == 0:                                   # pad K: 100 -> 128 (zeros)
            w = jnp.pad(w, ((0, LATENT_PAD - LATENT_DIM), (0, 0)))
        if idx == 4:                                   # pad N: action_dim -> 128
            w = jnp.pad(w, ((0, 0), (0, OUT_LANE_PAD - action_dim)))
            b = jnp.pad(b, ((0, 0), (0, OUT_LANE_PAD - action_dim)))
        ws.append(w.astype(jnp.bfloat16))
        small[f"b{idx + 1}"] = b
        if idx in (1, 2, 3):                           # BatchNorm1d default init
            small[f"g{idx + 1}"] = jnp.ones((1, fout), jnp.float32)
            small[f"be{idx + 1}"] = jnp.zeros((1, fout), jnp.float32)
    scale = jnp.zeros((1, OUT_LANE_PAD), jnp.float32)
    scale = scale.at[0, :action_dim].set(jnp.asarray(scale_vec, jnp.float32))
    small["scale"] = scale

    pvec = jnp.zeros((1, PVEC_LEN), jnp.float32)
    for name, (off, n) in PVEC_OFFS.items():
        pvec = pvec.at[:, off:off + n].set(small[name])

    weights = tuple(ws) + (pvec,)
    return weights, small


def reference_forward(z, weights, small, action_dim):
    """Pure-JAX reference (f32 activations) using the same bf16 weights."""
    w1, w2, w3, w4, w5, _ = weights
    f32 = lambda a: a.astype(jnp.float32)
    zp = jnp.pad(z, ((0, 0), (0, LATENT_PAD - z.shape[1])))

    def leaky(h):
        return jnp.where(h > 0, h, LEAKY_SLOPE * h)

    def bn(h, g, be):
        mu = jnp.mean(h, axis=0, keepdims=True)
        var = jnp.mean((h - mu) ** 2, axis=0, keepdims=True)
        return g * (h - mu) / jnp.sqrt(var + BN_EPS) + be

    h = leaky(zp @ f32(w1) + small["b1"])
    h = leaky(bn(h @ f32(w2) + small["b2"], small["g2"], small["be2"]))
    h = leaky(bn(h @ f32(w3) + small["b3"], small["g3"], small["be3"]))
    h = leaky(bn(h @ f32(w4) + small["b4"], small["g4"], small["be4"]))
    out = small["scale"] * jnp.tanh(h @ f32(w5) + small["b5"])
    return out[:, :action_dim]


if __name__ == "__main__":
    action_dim = 4
    batch = 8
    scale_vec = [2.0, 1.0, 0.5, 3.0]        # plays the role of `scale[:action_dim]`

    key = jax.random.PRNGKey(0)
    key, kz = jax.random.split(key)
    z = jax.random.normal(kz, (batch, LATENT_DIM), jnp.float32)

    weights, small = init_params(key, action_dim, scale_vec)

    out = generator_forward(z, weights, action_dim)
    out = jax.block_until_ready(out)

    ref = reference_forward(z, weights, small, action_dim)
    assert out.shape == (batch, action_dim)
    assert bool(jnp.all(jnp.isfinite(out)))
    assert bool(jnp.allclose(out, ref, rtol=5e-2, atol=5e-2)), (out, ref)

    print("KERNEL_OK")
</pallas_src>

<mosaic_0001>
module attributes {stable_mosaic.version = 11 : i64} {
  func.func @kernel(%arg0: memref<8x100xf32, #tpu.memory_space<vmem>>, %arg1: memref<128x128xbf16, #tpu.memory_space<vmem>>, %arg2: memref<128x256xbf16, #tpu.memory_space<vmem>>, %arg3: memref<256x512xbf16, #tpu.memory_space<vmem>>, %arg4: memref<512x1024xbf16, #tpu.memory_space<any>>, %arg5: memref<1024x128xbf16, #tpu.memory_space<any>>, %arg6: memref<1x5760xf32, #tpu.memory_space<vmem>>, %arg7: memref<16x128xf32, #tpu.memory_space<vmem>>, %arg8: memref<16x128xf32, #tpu.memory_space<vmem>>, %arg9: memref<512x1024xbf16, #tpu.memory_space<vmem>>, %arg10: memref<1024x128xbf16, #tpu.memory_space<vmem>>, %arg11: memref<2x!tpu.dma_semaphore, #tpu.memory_space<semaphore_mem>>) attributes {dimension_semantics = [], scalar_prefetch = 0 : i64, scratch_operands = 4 : i64, tpu.core_type = #tpu.core_type<tc>} {
    %c0_i32 = arith.constant 0 : i32
    %0 = tpu.memref_slice %arg11[%c0_i32] : memref<2x!tpu.dma_semaphore, #tpu.memory_space<semaphore_mem>> -> memref<1x!tpu.dma_semaphore, #tpu.memory_space<semaphore_mem>>
    %1 = tpu.memref_squeeze %0 : memref<1x!tpu.dma_semaphore, #tpu.memory_space<semaphore_mem>> -> memref<!tpu.dma_semaphore, #tpu.memory_space<semaphore_mem>>
    tpu.enqueue_dma source(%arg4 : memref<512x1024xbf16, #tpu.memory_space<any>>) target(%arg9 : memref<512x1024xbf16, #tpu.memory_space<vmem>>) target_semaphore(%1 : memref<!tpu.dma_semaphore, #tpu.memory_space<semaphore_mem>>)
    %c1_i32 = arith.constant 1 : i32
    %2 = tpu.memref_slice %arg11[%c1_i32] : memref<2x!tpu.dma_semaphore, #tpu.memory_space<semaphore_mem>> -> memref<1x!tpu.dma_semaphore, #tpu.memory_space<semaphore_mem>>
    %3 = tpu.memref_squeeze %2 : memref<1x!tpu.dma_semaphore, #tpu.memory_space<semaphore_mem>> -> memref<!tpu.dma_semaphore, #tpu.memory_space<semaphore_mem>>
    tpu.enqueue_dma source(%arg5 : memref<1024x128xbf16, #tpu.memory_space<any>>) target(%arg10 : memref<1024x128xbf16, #tpu.memory_space<vmem>>) target_semaphore(%3 : memref<!tpu.dma_semaphore, #tpu.memory_space<semaphore_mem>>)
    %4 = tpu.iota {dimensions = array<i32: 0>} : vector<16x1xi32>
    %c8_i32 = arith.constant 8 : i32
    %5 = vector.broadcast %c8_i32 : i32 to vector<16x1xi32>
    %6 = arith.cmpi slt, %4, %5 : vector<16x1xi32>
    %7 = arith.extui %6 : vector<16x1xi1> to vector<16x1xi32>
    %8 = arith.sitofp %7 : vector<16x1xi32> to vector<16x1xf32>
    %cst = arith.constant 0.000000e+00 : f32
    %9 = vector.broadcast %cst : f32 to vector<16x128xf32>
    %c0 = arith.constant 0 : index
    %c0_0 = arith.constant 0 : index
    %10 = vector.load %arg8[%c0, %c0_0] : memref<16x128xf32, #tpu.memory_space<vmem>>, vector<16x128xf32>
    tpu.vector_store %arg8[%c0, %c0_0], %9 {strides = array<i32>} : memref<16x128xf32, #tpu.memory_space<vmem>>, vector<16x128xf32>,
    %c0_1 = arith.constant 0 : index
    %c0_2 = arith.constant 0 : index
    %11 = vector.load %arg0[%c0_1, %c0_2] : memref<8x100xf32, #tpu.memory_space<vmem>>, vector<8x100xf32>
    %c0_3 = arith.constant 0 : index
    %c0_4 = arith.constant 0 : index
    %12 = vector.load %arg8[%c0_3, %c0_4] : memref<16x128xf32, #tpu.memory_space<vmem>>, vector<8x100xf32>
    tpu.vector_store %arg8[%c0_3, %c0_4], %11 {strides = array<i32>} : memref<16x128xf32, #tpu.memory_space<vmem>>, vector<8x100xf32>,
    %c0_5 = arith.constant 0 : index
    %c0_6 = arith.constant 0 : index
    %13 = vector.load %arg8[%c0_5, %c0_6] : memref<16x128xf32, #tpu.memory_space<vmem>>, vector<16x128xf32>
    %14 = arith.truncf %13 : vector<16x128xf32> to vector<16x128xbf16>
    %c0_7 = arith.constant 0 : index
    %c0_8 = arith.constant 0 : index
    %15 = vector.load %arg1[%c0_7, %c0_8] : memref<128x128xbf16, #tpu.memory_space<vmem>>, vector<128x128xbf16>
    %c0_9 = arith.constant 0 : index
    %c0_10 = arith.constant 0 : index
    %16 = vector.load %arg6[%c0_9, %c0_10] : memref<1x5760xf32, #tpu.memory_space<vmem>>, vector<1x128xf32>
    %cst_11 = arith.constant dense<0.000000e+00> : vector<16x128xf32>
    %17 = tpu.matmul %14, %15, %cst_11 {dimension_numbers = #tpu.dot_dimension_numbers<[1], [0], [0], [1], [0, 0, 1, 1], [], []>} : vector<16x128xbf16>, vector<128x128xbf16>, vector<16x128xf32> -> vector<16x128xf32>
    %18 = vector.broadcast %16 : vector<1x128xf32> to vector<16x128xf32>
    %19 = arith.addf %17, %18 : vector<16x128xf32>
    %cst_12 = arith.constant 2.000000e-01 : f32
    %20 = vector.broadcast %cst_12 : f32 to vector<16x128xf32>
    %21 = arith.mulf %20, %19 : vector<16x128xf32>
    %22 = arith.maximumf %19, %21 : vector<16x128xf32>
    %23 = arith.truncf %22 : vector<16x128xf32> to vector<16x128xbf16>
    %c0_13 = arith.constant 0 : index
    %c0_14 = arith.constant 0 : index
    %24 = vector.load %arg2[%c0_13, %c0_14] : memref<128x256xbf16, #tpu.memory_space<vmem>>, vector<128x256xbf16>
    %c0_15 = arith.constant 0 : index
    %c128 = arith.constant 128 : index
    %25 = vector.load %arg6[%c0_15, %c128] : memref<1x5760xf32, #tpu.memory_space<vmem>>, vector<1x256xf32>
    %cst_16 = arith.constant dense<0.000000e+00> : vector<16x256xf32>
    %26 = tpu.matmul %23, %24, %cst_16 {dimension_numbers = #tpu.dot_dimension_numbers<[1], [0], [0], [1], [0, 0, 1, 1], [], []>} : vector<16x128xbf16>, vector<128x256xbf16>, vector<16x256xf32> -> vector<16x256xf32>
    %27 = vector.broadcast %25 : vector<1x256xf32> to vector<16x256xf32>
    %28 = arith.addf %26, %27 : vector<16x256xf32>
    %c0_17 = arith.constant 0 : index
    %c384 = arith.constant 384 : index
    %29 = vector.load %arg6[%c0_17, %c384] : memref<1x5760xf32, #tpu.memory_space<vmem>>, vector<1x256xf32>
    %c0_18 = arith.constant 0 : index
    %c640 = arith.constant 640 : index
    %30 = vector.load %arg6[%c0_18, %c640] : memref<1x5760xf32, #tpu.memory_space<vmem>>, vector<1x256xf32>
    %31 = vector.broadcast %8 : vector<16x1xf32> to vector<16x256xf32>
    %32 = arith.mulf %28, %31 : vector<16x256xf32>
    %cst_19 = arith.constant dense<0.000000e+00> : vector<256xf32>
    %33 = vector.multi_reduction <add>, %32, %cst_19 [0] : vector<16x256xf32> to vector<256xf32>
    %34 = vector.shape_cast %33 : vector<256xf32> to vector<1x256xf32>
    %35 = arith.mulf %32, %32 : vector<16x256xf32>
    %cst_20 = arith.constant dense<0.000000e+00> : vector<256xf32>
    %36 = vector.multi_reduction <add>, %35, %cst_20 [0] : vector<16x256xf32> to vector<256xf32>
    %37 = vector.shape_cast %36 : vector<256xf32> to vector<1x256xf32>
    %cst_21 = arith.constant 1.250000e-01 : f32
    %38 = vector.broadcast %cst_21 : f32 to vector<1x256xf32>
    %39 = arith.mulf %34, %38 : vector<1x256xf32>
    %cst_22 = arith.constant 1.250000e-01 : f32
    %40 = vector.broadcast %cst_22 : f32 to vector<1x256xf32>
    %41 = arith.mulf %37, %40 : vector<1x256xf32>
    %42 = arith.mulf %39, %39 : vector<1x256xf32>
    %43 = arith.subf %41, %42 : vector<1x256xf32>
    %cst_23 = arith.constant 0.000000e+00 : f32
    %44 = vector.broadcast %cst_23 : f32 to vector<1x256xf32>
    %45 = arith.maximumf %43, %44 : vector<1x256xf32>
    %cst_24 = arith.constant 8.000000e-01 : f32
    %46 = vector.broadcast %cst_24 : f32 to vector<1x256xf32>
    %47 = arith.addf %45, %46 : vector<1x256xf32>
    %48 = math.rsqrt %47 : vector<1x256xf32>
    %49 = arith.mulf %29, %48 : vector<1x256xf32>
    %50 = arith.mulf %39, %49 : vector<1x256xf32>
    %51 = arith.subf %30, %50 : vector<1x256xf32>
    %52 = vector.broadcast %49 : vector<1x256xf32> to vector<16x256xf32>
    %53 = arith.mulf %28, %52 : vector<16x256xf32>
    %54 = vector.broadcast %51 : vector<1x256xf32> to vector<16x256xf32>
    %55 = arith.addf %53, %54 : vector<16x256xf32>
    %cst_25 = arith.constant 2.000000e-01 : f32
    %56 = vector.broadcast %cst_25 : f32 to vector<16x256xf32>
    %57 = arith.mulf %56, %55 : vector<16x256xf32>
    %58 = arith.maximumf %55, %57 : vector<16x256xf32>
    %59 = arith.truncf %58 : vector<16x256xf32> to vector<16x256xbf16>
    %c0_26 = arith.constant 0 : index
    %c0_27 = arith.constant 0 : index
    %60 = vector.load %arg3[%c0_26, %c0_27] : memref<256x512xbf16, #tpu.memory_space<vmem>>, vector<256x512xbf16>
    %c0_28 = arith.constant 0 : index
    %c896 = arith.constant 896 : index
    %61 = vector.load %arg6[%c0_28, %c896] : memref<1x5760xf32, #tpu.memory_space<vmem>>, vector<1x512xf32>
    %cst_29 = arith.constant dense<0.000000e+00> : vector<16x512xf32>
    %62 = tpu.matmul %59, %60, %cst_29 {dimension_numbers = #tpu.dot_dimension_numbers<[1], [0], [0], [1], [0, 0, 1, 1], [], []>} : vector<16x256xbf16>, vector<256x512xbf16>, vector<16x512xf32> -> vector<16x512xf32>
    %63 = vector.broadcast %61 : vector<1x512xf32> to vector<16x512xf32>
    %64 = arith.addf %62, %63 : vector<16x512xf32>
    %c0_30 = arith.constant 0 : index
    %c1408 = arith.constant 1408 : index
    %65 = vector.load %arg6[%c0_30, %c1408] : memref<1x5760xf32, #tpu.memory_space<vmem>>, vector<1x512xf32>
    %c0_31 = arith.constant 0 : index
    %c1920 = arith.constant 1920 : index
    %66 = vector.load %arg6[%c0_31, %c1920] : memref<1x5760xf32, #tpu.memory_space<vmem>>, vector<1x512xf32>
    %67 = vector.broadcast %8 : vector<16x1xf32> to vector<16x512xf32>
    %68 = arith.mulf %64, %67 : vector<16x512xf32>
    %cst_32 = arith.constant dense<0.000000e+00> : vector<512xf32>
    %69 = vector.multi_reduction <add>, %68, %cst_32 [0] : vector<16x512xf32> to vector<512xf32>
    %70 = vector.shape_cast %69 : vector<512xf32> to vector<1x512xf32>
    %71 = arith.mulf %68, %68 : vector<16x512xf32>
    %cst_33 = arith.constant dense<0.000000e+00> : vector<512xf32>
    %72 = vector.multi_reduction <add>, %71, %cst_33 [0] : vector<16x512xf32> to vector<512xf32>
    %73 = vector.shape_cast %72 : vector<512xf32> to vector<1x512xf32>
    %cst_34 = arith.constant 1.250000e-01 : f32
    %74 = vector.broadcast %cst_34 : f32 to vector<1x512xf32>
    %75 = arith.mulf %70, %74 : vector<1x512xf32>
    %cst_35 = arith.constant 1.250000e-01 : f32
    %76 = vector.broadcast %cst_35 : f32 to vector<1x512xf32>
    %77 = arith.mulf %73, %76 : vector<1x512xf32>
    %78 = arith.mulf %75, %75 : vector<1x512xf32>
    %79 = arith.subf %77, %78 : vector<1x512xf32>
    %cst_36 = arith.constant 0.000000e+00 : f32
    %80 = vector.broadcast %cst_36 : f32 to vector<1x512xf32>
    %81 = arith.maximumf %79, %80 : vector<1x512xf32>
    %cst_37 = arith.constant 8.000000e-01 : f32
    %82 = vector.broadcast %cst_37 : f32 to vector<1x512xf32>
    %83 = arith.addf %81, %82 : vector<1x512xf32>
    %84 = math.rsqrt %83 : vector<1x512xf32>
    %85 = arith.mulf %65, %84 : vector<1x512xf32>
    %86 = arith.mulf %75, %85 : vector<1x512xf32>
    %87 = arith.subf %66, %86 : vector<1x512xf32>
    %88 = vector.broadcast %85 : vector<1x512xf32> to vector<16x512xf32>
    %89 = arith.mulf %64, %88 : vector<16x512xf32>
    %90 = vector.broadcast %87 : vector<1x512xf32> to vector<16x512xf32>
    %91 = arith.addf %89, %90 : vector<16x512xf32>
    %cst_38 = arith.constant 2.000000e-01 : f32
    %92 = vector.broadcast %cst_38 : f32 to vector<16x512xf32>
    %93 = arith.mulf %92, %91 : vector<16x512xf32>
    %94 = arith.maximumf %91, %93 : vector<16x512xf32>
    %95 = arith.truncf %94 : vector<16x512xf32> to vector<16x512xbf16>
    %c0_i32_39 = arith.constant 0 : i32
    %96 = tpu.memref_slice %arg11[%c0_i32_39] : memref<2x!tpu.dma_semaphore, #tpu.memory_space<semaphore_mem>> -> memref<1x!tpu.dma_semaphore, #tpu.memory_space<semaphore_mem>>
    %97 = tpu.memref_squeeze %96 : memref<1x!tpu.dma_semaphore, #tpu.memory_space<semaphore_mem>> -> memref<!tpu.dma_semaphore, #tpu.memory_space<semaphore_mem>>
    tpu.wait_dma2 semaphore(%97 : memref<!tpu.dma_semaphore, #tpu.memory_space<semaphore_mem>>) src(%arg4 : memref<512x1024xbf16, #tpu.memory_space<any>>) dst(%arg9 : memref<512x1024xbf16, #tpu.memory_space<vmem>>)
    %c0_40 = arith.constant 0 : index
    %c0_41 = arith.constant 0 : index
    %98 = vector.load %arg9[%c0_40, %c0_41] : memref<512x1024xbf16, #tpu.memory_space<vmem>>, vector<512x1024xbf16>
    %c0_42 = arith.constant 0 : index
    %c2432 = arith.constant 2432 : index
    %99 = vector.load %arg6[%c0_42, %c2432] : memref<1x5760xf32, #tpu.memory_space<vmem>>, vector<1x1024xf32>
    %cst_43 = arith.constant dense<0.000000e+00> : vector<16x1024xf32>
    %100 = tpu.matmul %95, %98, %cst_43 {dimension_numbers = #tpu.dot_dimension_numbers<[1], [0], [0], [1], [0, 0, 1, 1], [], []>} : vector<16x512xbf16>, vector<512x1024xbf16>, vector<16x1024xf32> -> vector<16x1024xf32>
    %101 = vector.broadcast %99 : vector<1x1024xf32> to vector<16x1024xf32>
    %102 = arith.addf %100, %101 : vector<16x1024xf32>
    %c0_44 = arith.constant 0 : index
    %c3456 = arith.constant 3456 : index
    %103 = vector.load %arg6[%c0_44, %c3456] : memref<1x5760xf32, #tpu.memory_space<vmem>>, vector<1x1024xf32>
    %c0_45 = arith.constant 0 : index
    %c4480 = arith.constant 4480 : index
    %104 = vector.load %arg6[%c0_45, %c4480] : memref<1x5760xf32, #tpu.memory_space<vmem>>, vector<1x1024xf32>
    %105 = vector.broadcast %8 : vector<16x1xf32> to vector<16x1024xf32>
    %106 = arith.mulf %102, %105 : vector<16x1024xf32>
    %cst_46 = arith.constant dense<0.000000e+00> : vector<1024xf32>
    %107 = vector.multi_reduction <add>, %106, %cst_46 [0] : vector<16x1024xf32> to vector<1024xf32>
    %108 = vector.shape_cast %107 : vector<1024xf32> to vector<1x1024xf32>
    %109 = arith.mulf %106, %106 : vector<16x1024xf32>
    %cst_47 = arith.constant dense<0.000000e+00> : vector<1024xf32>
    %110 = vector.multi_reduction <add>, %109, %cst_47 [0] : vector<16x1024xf32> to vector<1024xf32>
    %111 = vector.shape_cast %110 : vector<1024xf32> to vector<1x1024xf32>
    %cst_48 = arith.constant 1.250000e-01 : f32
    %112 = vector.broadcast %cst_48 : f32 to vector<1x1024xf32>
    %113 = arith.mulf %108, %112 : vector<1x1024xf32>
    %cst_49 = arith.constant 1.250000e-01 : f32
    %114 = vector.broadcast %cst_49 : f32 to vector<1x1024xf32>
    %115 = arith.mulf %111, %114 : vector<1x1024xf32>
    %116 = arith.mulf %113, %113 : vector<1x1024xf32>
    %117 = arith.subf %115, %116 : vector<1x1024xf32>
    %cst_50 = arith.constant 0.000000e+00 : f32
    %118 = vector.broadcast %cst_50 : f32 to vector<1x1024xf32>
    %119 = arith.maximumf %117, %118 : vector<1x1024xf32>
    %cst_51 = arith.constant 8.000000e-01 : f32
    %120 = vector.broadcast %cst_51 : f32 to vector<1x1024xf32>
    %121 = arith.addf %119, %120 : vector<1x1024xf32>
    %122 = math.rsqrt %121 : vector<1x1024xf32>
    %123 = arith.mulf %103, %122 : vector<1x1024xf32>
    %124 = arith.mulf %113, %123 : vector<1x1024xf32>
    %125 = arith.subf %104, %124 : vector<1x1024xf32>
    %126 = vector.broadcast %123 : vector<1x1024xf32> to vector<16x1024xf32>
    %127 = arith.mulf %102, %126 : vector<16x1024xf32>
    %128 = vector.broadcast %125 : vector<1x1024xf32> to vector<16x1024xf32>
    %129 = arith.addf %127, %128 : vector<16x1024xf32>
    %cst_52 = arith.constant 2.000000e-01 : f32
    %130 = vector.broadcast %cst_52 : f32 to vector<16x1024xf32>
    %131 = arith.mulf %130, %129 : vector<16x1024xf32>
    %132 = arith.maximumf %129, %131 : vector<16x1024xf32>
    %133 = arith.truncf %132 : vector<16x1024xf32> to vector<16x1024xbf16>
    %c1_i32_53 = arith.constant 1 : i32
    %134 = tpu.memref_slice %arg11[%c1_i32_53] : memref<2x!tpu.dma_semaphore, #tpu.memory_space<semaphore_mem>> -> memref<1x!tpu.dma_semaphore, #tpu.memory_space<semaphore_mem>>
    %135 = tpu.memref_squeeze %134 : memref<1x!tpu.dma_semaphore, #tpu.memory_space<semaphore_mem>> -> memref<!tpu.dma_semaphore, #tpu.memory_space<semaphore_mem>>
    tpu.wait_dma2 semaphore(%135 : memref<!tpu.dma_semaphore, #tpu.memory_space<semaphore_mem>>) src(%arg5 : memref<1024x128xbf16, #tpu.memory_space<any>>) dst(%arg10 : memref<1024x128xbf16, #tpu.memory_space<vmem>>)
    %c0_54 = arith.constant 0 : index
    %c0_55 = arith.constant 0 : index
    %136 = vector.load %arg10[%c0_54, %c0_55] : memref<1024x128xbf16, #tpu.memory_space<vmem>>, vector<1024x128xbf16>
    %c0_56 = arith.constant 0 : index
    %c5504 = arith.constant 5504 : index
    %137 = vector.load %arg6[%c0_56, %c5504] : memref<1x5760xf32, #tpu.memory_space<vmem>>, vector<1x128xf32>
    %cst_57 = arith.constant dense<0.000000e+00> : vector<16x128xf32>
    %138 = tpu.matmul %133, %136, %cst_57 {dimension_numbers = #tpu.dot_dimension_numbers<[1], [0], [0], [1], [0, 0, 1, 1], [], []>} : vector<16x1024xbf16>, vector<1024x128xbf16>, vector<16x128xf32> -> vector<16x128xf32>
    %139 = vector.broadcast %137 : vector<1x128xf32> to vector<16x128xf32>
    %140 = arith.addf %138, %139 : vector<16x128xf32>
    %141 = math.tanh %140 : vector<16x128xf32>
    %c0_58 = arith.constant 0 : index
    %c5632 = arith.constant 5632 : index
    %142 = vector.load %arg6[%c0_58, %c5632] : memref<1x5760xf32, #tpu.memory_space<vmem>>, vector<1x128xf32>
    %143 = vector.broadcast %142 : vector<1x128xf32> to vector<16x128xf32>
    %144 = arith.mulf %143, %141 : vector<16x128xf32>
    %c0_59 = arith.constant 0 : index
    %c0_60 = arith.constant 0 : index
    %145 = vector.load %arg7[%c0_59, %c0_60] : memref<16x128xf32, #tpu.memory_space<vmem>>, vector<16x128xf32>
    tpu.vector_store %arg7[%c0_59, %c0_60], %144 {strides = array<i32>} : memref<16x128xf32, #tpu.memory_space<vmem>>, vector<16x128xf32>,
    return
  }
}

</mosaic_0001>

<llo_original>
// kernel: tpu_custom_call.1
$region0: #{tpu_custom_call.1}
  #allocation0 [shape = 'u32[]', space=smem, size = 0x4, offset = 0x4, fixed_abs, tag = 'smem constant byte address 0x4 - core index']
  #allocation1 [shape = 'u32[144,128]{1,0:T(1,128)}', space=vmem, size = 0x12000, scoped, tag = 'internal scratch']
  #allocation2 [shape = 'f32[16,128]{1,0:T(8,128)}', space=vmem, size = 0x2000, scoped, tag = 'scratch operand']
  #allocation3 [shape = 'bf16[512,1024]{1,0:T(16,128)(2,1)}', space=vmem, size = 0x100000, scoped, tag = 'scratch operand']
  #allocation4 [shape = 'bf16[1024,128]{1,0:T(16,128)(2,1)}', space=vmem, size = 0x40000, scoped, tag = 'scratch operand']
  #allocation5 [shape = 's32[2]{0}', space=sflag, size = 0x8, scoped, tag = 'scratch operand']
  #allocation16 [shape = 's32[]', space=sflag, size = 0x4, offset = 0, fixed_abs, tag = 'sflag constant byte address 0x0 - dummy sync flag']
  #allocation18 [shape = 's32[]', space=sflag, size = 0x4, offset = 0, fixed_abs, tag = 'sflag constant byte address 0x0 - dummy sync flag']
  #allocation19 [shape = 's32[]', space=sflag, size = 0x4, offset = 0, fixed_abs, tag = 'sflag constant byte address 0x0 - dummy sync flag']
  #allocation20 [shape = 'u32[]', space=smem, size = 0x4, offset = 0x44, fixed_abs, tag = 'smem constant byte address 0x44 - assertion arg 0']
  #allocation21 [shape = 'u32[]', space=smem, size = 0x4, offset = 0x48, fixed_abs, tag = 'smem constant byte address 0x48 - assertion arg 1']
  %s0 = inlined_call_operand.hbm [shape: f32[8,100], index: 0, kind: input, shape index: {}]
  %s1 = inlined_call_operand.hbm [shape: bf16[128,128], index: 1, kind: input, shape index: {}]
  %s2 = inlined_call_operand.hbm [shape: bf16[128,256], index: 2, kind: input, shape index: {}]
  %s3 = inlined_call_operand.hbm [shape: bf16[256,512], index: 3, kind: input, shape index: {}]
  %s4 = inlined_call_operand.hbm [shape: bf16[512,1024], index: 4, kind: input, shape index: {}]
  %s5 = inlined_call_operand.hbm [shape: bf16[1024,128], index: 5, kind: input, shape index: {}]
  %s6 = inlined_call_operand.hbm [shape: f32[1,5760], index: 6, kind: input, shape index: {}]
  %s7 = inlined_call_operand.hbm [shape: f32[16,128], index: 7, kind: output, shape index: {}]
  %s8 = sld [smem:[#allocation0]]
  $region54: #{tpu_custom_call.1} parent=0
    _
  %s10 = ssub.s32 1, %s8
  %s11 = scalar_select 0, %s10, %s8
  $region1: #{tpu_custom_call.1} parent=0
    #allocation6 [shape = 'u8[4096]{0}', space=vmem, size = 0x1000, scoped, tag = 'input window, operand 0, single buffered']
    #allocation7 [shape = 's32[1]{0}', space=sflag, size = 0x4, scoped, tag = 'scoped memory for tpu_custom_call.1']
    #allocation8 [shape = 's32[1]{0}', space=sflag, size = 0x4, scoped, tag = 'scoped memory for tpu_custom_call.1']
    #allocation9 [shape = 'u8[32768]{0}', space=vmem, size = 0x8000, scoped, tag = 'input window, operand 1, single buffered']
    #allocation10 [shape = 's32[1]{0}', space=sflag, size = 0x4, scoped, tag = 'scoped memory for tpu_custom_call.1']
    #allocation11 [shape = 'u8[65536]{0}', space=vmem, size = 0x10000, scoped, tag = 'input window, operand 2, single buffered']
    #allocation12 [shape = 'u8[262144]{0}', space=vmem, size = 0x40000, scoped, tag = 'input window, operand 3, single buffered']
    #allocation13 [shape = 's32[1]{0}', space=sflag, size = 0x4, scoped, tag = 'scoped memory for tpu_custom_call.1']
    #allocation14 [shape = 'u8[23040]{0}', space=vmem, size = 0x5c00, scoped, tag = 'input window, operand 6, single buffered']
    #allocation15 [shape = 'u8[8192]{0}', space=vmem, size = 0x2000, scoped, tag = 'output window, operand 0, single buffered']
    #allocation17 [shape = 'u32[9]{0}', space=smem, size = 0x24, scoped, tag = 'DMA stride descriptor']
    %12 = vsyncpa [#allocation7], 0
    %13 = vsyncpa [#allocation10], 0
    %14 = vsyncpa [#allocation13], 0
    %15 = vsyncpa [#allocation8], 0
    // Predicated region
    $region2: #{tpu_custom_call.1} parent=1 // pred_check
      _
    $region3: #{tpu_custom_call.1} parent=1 // pred_check_branch
      %17 = sbr.rel (0) target = $region5
    $region4: #{tpu_custom_call.1} parent=1 // pred_region
      %s19 = ssub.s32 128, 128
      %20 = vsyncadd [#allocation7], %s19
      %s22 = sshll.u32 [#allocation6], 4
      %s23 = int_to_ptr.vmem [resolvable:$true] %s22
      %25 = dma.hbm_to_vmem [thread:$0]  %s0, 128, %s23, [#allocation7]
    $region5: #{tpu_custom_call.1} parent=1 // pred_fallthru
      _
    // Predicated region
    $region6: #{tpu_custom_call.1} parent=1 // pred_check
      _
    $region7: #{tpu_custom_call.1} parent=1 // pred_check_branch
      %27 = sbr.rel (0) target = $region9
    $region8: #{tpu_custom_call.1} parent=1 // pred_region
      %s29 = ssub.s32 1024, 1024
      %30 = vsyncadd [#allocation10], %s29
      %s31 = sshll.u32 [#allocation9], 4
      %s32 = int_to_ptr.vmem [resolvable:$true] %s31
      %37 = dma.hbm_to_vmem [thread:$0]  %s1, 1024, %s32, [#allocation10], 64, 64, 4
    $region9: #{tpu_custom_call.1} parent=1 // pred_fallthru
      _
    // Predicated region
    $region10: #{tpu_custom_call.1} parent=1 // pred_check
      _
    $region11: #{tpu_custom_call.1} parent=1 // pred_check_branch
      %39 = sbr.rel (0) target = $region13
    $region12: #{tpu_custom_call.1} parent=1 // pred_region
      %s41 = ssub.s32 2048, 2048
      %42 = vsyncadd [#allocation10], %s41
      %s43 = sshll.u32 [#allocation11], 4
      %s44 = int_to_ptr.vmem [resolvable:$true] %s43
      %49 = dma.hbm_to_vmem [thread:$0]  %s2, 2048, %s44, [#allocation10], 128, 128, 8
    $region13: #{tpu_custom_call.1} parent=1 // pred_fallthru
      _
    // Predicated region
    $region14: #{tpu_custom_call.1} parent=1 // pred_check
      _
    $region15: #{tpu_custom_call.1} parent=1 // pred_check_branch
      %51 = sbr.rel (0) target = $region17
    $region16: #{tpu_custom_call.1} parent=1 // pred_region
      %s53 = ssub.s32 8192, 8192
      %54 = vsyncadd [#allocation13], %s53
      %s55 = sshll.u32 [#allocation12], 4
      %s56 = int_to_ptr.vmem [resolvable:$true] %s55
      %61 = dma.hbm_to_vmem [thread:$0]  %s3, 8192, %s56, [#allocation13], 256, 256, 16
    $region17: #{tpu_custom_call.1} parent=1 // pred_fallthru
      _
    // Predicated region
    $region18: #{tpu_custom_call.1} parent=1 // pred_check
      _
    $region19: #{tpu_custom_call.1} parent=1 // pred_check_branch
      %63 = sbr.rel (0) target = $region21
    $region20: #{tpu_custom_call.1} parent=1 // pred_region
      %s65 = ssub.s32 720, 720
      %66 = vsyncadd [#allocation13], %s65
      %s68 = sshll.u32 [#allocation14], 4
      %s69 = int_to_ptr.vmem [resolvable:$true] %s68
      %71 = dma.hbm_to_vmem [thread:$0]  %s6, 720, %s69, [#allocation13]
    $region21: #{tpu_custom_call.1} parent=1 // pred_fallthru
      _
    // Predicated region
    $region22: #{tpu_custom_call.1} parent=1 // pred_check
      _
    $region23: #{tpu_custom_call.1} parent=1 // pred_check_branch
      %73 = sbr.rel (0) target = $region25
    $region24: #{tpu_custom_call.1} parent=1 // pred_region
      %74 = dma.done [#allocation7], 128
    $region25: #{tpu_custom_call.1} parent=1 // pred_fallthru
      _
    // Predicated region
    $region26: #{tpu_custom_call.1} parent=1 // pred_check
      _
    $region27: #{tpu_custom_call.1} parent=1 // pred_check_branch
      %76 = sbr.rel (0) target = $region29
    $region28: #{tpu_custom_call.1} parent=1 // pred_region
      %77 = dma.done [#allocation10], 1024
    $region29: #{tpu_custom_call.1} parent=1 // pred_fallthru
      _
    // Predicated region
    $region30: #{tpu_custom_call.1} parent=1 // pred_check
      _
    $region31: #{tpu_custom_call.1} parent=1 // pred_check_branch
      %79 = sbr.rel (0) target = $region33
    $region32: #{tpu_custom_call.1} parent=1 // pred_region
      %80 = dma.done [#allocation10], 2048
    $region33: #{tpu_custom_call.1} parent=1 // pred_fallthru
      _
    // Predicated region
    $region34: #{tpu_custom_call.1} parent=1 // pred_check
      _
    $region35: #{tpu_custom_call.1} parent=1 // pred_check_branch
      %82 = sbr.rel (0) target = $region37
    $region36: #{tpu_custom_call.1} parent=1 // pred_region
      %83 = dma.done [#allocation13], 8192
    $region37: #{tpu_custom_call.1} parent=1 // pred_fallthru
      _
    // Predicated region
    $region38: #{tpu_custom_call.1} parent=1 // pred_check
      _
    $region39: #{tpu_custom_call.1} parent=1 // pred_check_branch
      %85 = sbr.rel (0) target = $region41
    $region40: #{tpu_custom_call.1} parent=1 // pred_region
      %86 = dma.done [#allocation13], 720
    $region41: #{tpu_custom_call.1} parent=1 // pred_fallthru
      _
    %s89 = sshll.u32 1, 14
    %s90 = sxor.u32 4294967295, %s89
    %s92 = sld [smem:[#allocation0]]
    %s93 = sadd.s32 2, %s92
    %s95 = sshll.u32 7, 26
    %s96 = sxor.u32 4294967295, %s95
    %s97 = sand.u32 0, %s96
    %s98 = sshll.u32 %s93, 26
    %s99 = sor.u32 %s97, %s98
    %s100 = sshll.u32 [#allocation3], 4
    %s101 = int_to_ptr.vmem [resolvable:$true] %s100
    %104 = sst [smem:[#allocation17]] 1024
    %s105 = scalar_lea.smem [#allocation17], 1
    %106 = sst [smem:[%s105]] 1024
    %s107 = scalar_lea.smem [#allocation17], 2
    %108 = sst [smem:[%s107]] 8
    %s109 = scalar_lea.smem [#allocation17], 3
    %110 = sst [smem:[%s109]] 64
    %s111 = scalar_lea.smem [#allocation17], 4
    %112 = sst [smem:[%s111]] 128
    %s113 = scalar_lea.smem [#allocation17], 5
    %114 = sst [smem:[%s113]] 2
    %s115 = scalar_lea.smem [#allocation17], 6
    %116 = sst [smem:[%s115]] 512
    %s117 = scalar_lea.smem [#allocation17], 7
    %118 = sst [smem:[%s117]] 64
    %s119 = scalar_lea.smem [#allocation17], 8
    %120 = sst [smem:[%s119]] 4
    %122 = dma.general %s4, 32768, %s101, [#allocation5], [#allocation16], [#allocation17], %s99, 0
    %s123 = scalar_lea.sflag [#allocation5], 1
    // Predicated region
    $region42: #{tpu_custom_call.1} parent=1 // pred_check
      _
    $region43: #{tpu_custom_call.1} parent=1 // pred_check_branch
      %125 = sbr.rel target = $region45
    $region44: #{tpu_custom_call.1} parent=1 // pred_region
      %126 = sst [smem:[#allocation20]] [#allocation19]
      %127 = sst [smem:[#allocation21]] [#allocation18]
    $region45: #{tpu_custom_call.1} parent=1 // pred_fallthru
      _
    %129 = shalt.err (0)
    %s131 = sshll.u32 [#allocation4], 4
    %s132 = int_to_ptr.vmem [resolvable:$true] %s131
    %134 = dma.hbm_to_vmem [thread:$0]  %s5, 8192, %s132, %s123
    %v135 = vlaneseq
    %v136 = vshrl.u32 %v135, 7
    %v137 = vadd.s32 %v136, 8
    %vm138 = vcmp.lt.s32.totalorder %v136, 8
    %vm139 = vcmp.lt.s32.totalorder %v137, 8
    %v140 = vsel %vm138, 1, 0
    %v141 = vsel %vm139, 1, 0
    %v142 = vcvt.s32.f32 %v140
    %v143 = vcvt.s32.f32 %v141
    %144 = vst [vmem:[#allocation2] sm:$0xff] 0.0
    %145 = vst [vmem:[#allocation2 + $0x8] sm:$0xff] 0.0
    %v146 = vld [vmem:[#allocation6] sm:$0xff]
    %vm147 = vcmask 818176
    %148 = vst.msk [vmem:[#allocation2] sm:$0xff] %vm147, %v146
    %v149 = vld [vmem:[#allocation2] sm:$0xff]
    %v150 = vld [vmem:[#allocation2 + $0x8] sm:$0xff]
    %v151 = vpack.c.bf16 %v150, %v149
    %v152 = vld [vmem:[#allocation9] sm:$0xf]
    %v153 = vld [vmem:[#allocation9 + $0x4] sm:$0xf]
    %v154 = vld [vmem:[#allocation9 + $0x8] sm:$0xf]
    %v155 = vld [vmem:[#allocation9 + $0xc] sm:$0xf]
    %v156 = vld [vmem:[#allocation9 + $0x10] sm:$0xf]
    %v157 = vld [vmem:[#allocation9 + $0x14] sm:$0xf]
    %v158 = vld [vmem:[#allocation9 + $0x18] sm:$0xf]
    %v159 = vld [vmem:[#allocation9 + $0x1c] sm:$0xf]
    %v160 = vld [vmem:[#allocation9 + $0x20] sm:$0xf]
    %v161 = vld [vmem:[#allocation9 + $0x24] sm:$0xf]
    %v162 = vld [vmem:[#allocation9 + $0x28] sm:$0xf]
    %v163 = vld [vmem:[#allocation9 + $0x2c] sm:$0xf]
    %v164 = vld [vmem:[#allocation9 + $0x30] sm:$0xf]
    %v165 = vld [vmem:[#allocation9 + $0x34] sm:$0xf]
    %v166 = vld [vmem:[#allocation9 + $0x38] sm:$0xf]
    %v167 = vld [vmem:[#allocation9 + $0x3c] sm:$0xf]
    %v168 = vld [vmem:[#allocation14] sm:$0x1]
    %v170 = vlaneseq
    %v171 = vshrl.u32 %v170, 7
    %v172 = vsub.s32 0, %v171
    %v173 = vrot.slane %v168, %v172
    %v191 = vunpack.c.l.b16 %v152
    %v192 = vunpack.c.l.b16 %v153
    %v193 = vunpack.c.l.b16 %v154
    %v194 = vunpack.c.l.b16 %v155
    %v195 = vunpack.c.l.b16 %v156
    %v196 = vunpack.c.l.b16 %v157
    %v197 = vunpack.c.l.b16 %v158
    %v198 = vunpack.c.l.b16 %v159
    %v199 = vunpack.c.l.b16 %v160
    %v200 = vunpack.c.l.b16 %v161
    %v201 = vunpack.c.l.b16 %v162
    %v202 = vunpack.c.l.b16 %v163
    %v203 = vunpack.c.l.b16 %v164
    %v204 = vunpack.c.l.b16 %v165
    %v205 = vunpack.c.l.b16 %v166
    %v206 = vunpack.c.l.b16 %v167
    %v207 = vpack.c.b16 %v192, %v191
    %v208 = vpack.c.b16 %v194, %v193
    %v209 = vpack.c.b16 %v196, %v195
    %v210 = vpack.c.b16 %v198, %v197
    %v211 = vpack.c.b16 %v200, %v199
    %v212 = vpack.c.b16 %v202, %v201
    %v213 = vpack.c.b16 %v204, %v203
    %v214 = vpack.c.b16 %v206, %v205
    %223 = vmatprep.subr.bf16.mxu0 0
    %224 = vmatpush1.bf16.msra.mxu0 %v207
    %225 = vmatprep.subr.bf16.mxu0 0
    %226 = vmatpush1.bf16.msra.mxu0 %v208
    %227 = vmatprep.subr.bf16.mxu0 0
    %228 = vmatpush1.bf16.msra.mxu0 %v209
    %229 = vmatprep.subr.bf16.mxu0 0
    %230 = vmatpush1.bf16.msra.mxu0 %v210
    %231 = vmatprep.subr.bf16.mxu0 0
    %232 = vmatpush1.bf16.msra.mxu0 %v211
    %233 = vmatprep.subr.bf16.mxu0 0
    %234 = vmatpush1.bf16.msra.mxu0 %v212
    %235 = vmatprep.subr.bf16.mxu0 0
    %236 = vmatpush1.bf16.msra.mxu0 %v213
    %237 = vmatprep.subr.bf16.mxu0 0
    %238 = vmatpush1.bf16.msra.mxu0 %v214
    %239 = vmatprep.subr.bf16.mxu0 0
    %240 = vmatpush1.bf16.msra.mxu0 0
    %241 = vmatprep.subr.bf16.mxu0 0
    %242 = vmatpush1.bf16.msra.mxu0 0
    %243 = vmatprep.subr.bf16.mxu0 0
    %244 = vmatpush1.bf16.msra.mxu0 0
    %245 = vmatprep.subr.bf16.mxu0 0
    %246 = vmatpush1.bf16.msra.mxu0 0
    %247 = vmatprep.subr.bf16.mxu0 0
    %248 = vmatpush1.bf16.msra.mxu0 0
    %249 = vmatprep.subr.bf16.mxu0 0
    %250 = vmatpush1.bf16.msra.mxu0 0
    %251 = vmatprep.subr.bf16.mxu0 0
    %252 = vmatpush1.bf16.msra.mxu0 0
    %253 = vmatprep.subr.bf16.mxu0 0
    %254 = vmatpush1.bf16.msra.mxu0 0
    %255 = vmatprep.mubr.bf16.mxu0 0
    %256 = vmatmul.mubr.bf16.gmra.mrb[0].mxu0 %v151
    %v257 = vpop.f32.mrb[0].mxu0
    %v258 = vadd.f32 %v173, %v257
    %v259 = vpop.f32.mrb[0].mxu0
    %v260 = vpop.f32.mrb[0].mxu0
    %v261 = vadd.f32 %v173, %v260
    %v262 = vpop.f32.mrb[0].mxu0
    %263 = vdwg.mxu0
    %v264 = vmul.f32 %v258, 0.2
    %v265 = vmul.f32 %v261, 0.2
    %v266 = vmax.f32 %v258, %v264
    %v267 = vmax.f32 %v261, %v265
    %v268 = vpack.c.bf16 %v267, %v266
    %v269 = vld [vmem:[#allocation11] sm:$0xff]
    %v270 = vld [vmem:[#allocation11 + $0x8] sm:$0xff]
    %v271 = vld [vmem:[#allocation11 + $0x10] sm:$0xff]
    %v272 = vld [vmem:[#allocation11 + $0x18] sm:$0xff]
    %v273 = vld [vmem:[#allocation11 + $0x20] sm:$0xff]
    %v274 = vld [vmem:[#allocation11 + $0x28] sm:$0xff]
    %v275 = vld [vmem:[#allocation11 + $0x30] sm:$0xff]
    %v276 = vld [vmem:[#allocation11 + $0x38] sm:$0xff]
    %v277 = vld [vmem:[#allocation11 + $0x40] sm:$0xff]
    %v278 = vld [vmem:[#allocation11 + $0x48] sm:$0xff]
    %v279 = vld [vmem:[#allocation11 + $0x50] sm:$0xff]
    %v280 = vld [vmem:[#allocation11 + $0x58] sm:$0xff]
    %v281 = vld [vmem:[#allocation11 + $0x60] sm:$0xff]
    %v282 = vld [vmem:[#allocation11 + $0x68] sm:$0xff]
    %v283 = vld [vmem:[#allocation11 + $0x70] sm:$0xff]
    %v284 = vld [vmem:[#allocation11 + $0x78] sm:$0xff]
    %v285 = vld [vmem:[#allocation14 + $0x1] sm:$0x3]
    %v287 = vlaneseq
    %v288 = vshrl.u32 %v287, 7
    %v289 = vsub.s32 0, %v288
    %v290 = vrot.slane %v285, %v289
    %v291 = vlaneseq
    %v292 = vshrl.u32 %v291, 7
    %v293 = vsub.s32 1, %v292
    %v294 = vrot.slane %v285, %v293
    %v313 = vunpack.c.l.b16 %v269
    %v314 = vunpack.c.h.b16 %v269
    %v315 = vunpack.c.l.b16 %v270
    %v316 = vunpack.c.h.b16 %v270
    %v317 = vunpack.c.l.b16 %v271
    %v318 = vunpack.c.h.b16 %v271
    %v319 = vunpack.c.l.b16 %v272
    %v320 = vunpack.c.h.b16 %v272
    %v321 = vunpack.c.l.b16 %v273
    %v322 = vunpack.c.h.b16 %v273
    %v323 = vunpack.c.l.b16 %v274
    %v324 = vunpack.c.h.b16 %v274
    %v325 = vunpack.c.l.b16 %v275
    %v326 = vunpack.c.h.b16 %v275
    %v327 = vunpack.c.l.b16 %v276
    %v328 = vunpack.c.h.b16 %v276
    %v329 = vunpack.c.l.b16 %v277
    %v330 = vunpack.c.h.b16 %v277
    %v331 = vunpack.c.l.b16 %v278
    %v332 = vunpack.c.h.b16 %v278
    %v333 = vunpack.c.l.b16 %v279
    %v334 = vunpack.c.h.b16 %v279
    %v335 = vunpack.c.l.b16 %v280
    %v336 = vunpack.c.h.b16 %v280
    %v337 = vunpack.c.l.b16 %v281
    %v338 = vunpack.c.h.b16 %v281
    %v339 = vunpack.c.l.b16 %v282
    %v340 = vunpack.c.h.b16 %v282
    %v341 = vunpack.c.l.b16 %v283
    %v342 = vunpack.c.h.b16 %v283
    %v343 = vunpack.c.l.b16 %v284
    %v344 = vunpack.c.h.b16 %v284
    %v345 = vpack.c.b16 %v315, %v313
    %v346 = vpack.c.b16 %v316, %v314
    %v347 = vpack.c.b16 %v319, %v317
    %v348 = vpack.c.b16 %v320, %v318
    %v349 = vpack.c.b16 %v323, %v321
    %v350 = vpack.c.b16 %v324, %v322
    %v351 = vpack.c.b16 %v327, %v325
    %v352 = vpack.c.b16 %v328, %v326
    %v353 = vpack.c.b16 %v331, %v329
    %v354 = vpack.c.b16 %v332, %v330
    %v355 = vpack.c.b16 %v335, %v333
    %v356 = vpack.c.b16 %v336, %v334
    %v357 = vpack.c.b16 %v339, %v337
    %v358 = vpack.c.b16 %v340, %v338
    %v359 = vpack.c.b16 %v343, %v341
    %v360 = vpack.c.b16 %v344, %v342
    %377 = vmatprep.subr.bf16.mxu0 %v346
    %378 = vmatpush1.bf16.msra.mxu0 %v345
    %379 = vmatprep.subr.bf16.mxu0 %v348
    %380 = vmatpush1.bf16.msra.mxu0 %v347
    %381 = vmatprep.subr.bf16.mxu0 %v350
    %382 = vmatpush1.bf16.msra.mxu0 %v349
    %383 = vmatprep.subr.bf16.mxu0 %v352
    %384 = vmatpush1.bf16.msra.mxu0 %v351
    %385 = vmatprep.subr.bf16.mxu0 %v354
    %386 = vmatpush1.bf16.msra.mxu0 %v353
    %387 = vmatprep.subr.bf16.mxu0 %v356
    %388 = vmatpush1.bf16.msra.mxu0 %v355
    %389 = vmatprep.subr.bf16.mxu0 %v358
    %390 = vmatpush1.bf16.msra.mxu0 %v357
    %391 = vmatprep.subr.bf16.mxu0 %v360
    %392 = vmatpush1.bf16.msra.mxu0 %v359
    %393 = vmatprep.subr.bf16.mxu0 0
    %394 = vmatpush1.bf16.msra.mxu0 0
    %395 = vmatprep.subr.bf16.mxu0 0
    %396 = vmatpush1.bf16.msra.mxu0 0
    %397 = vmatprep.subr.bf16.mxu0 0
    %398 = vmatpush1.bf16.msra.mxu0 0
    %399 = vmatprep.subr.bf16.mxu0 0
    %400 = vmatpush1.bf16.msra.mxu0 0
    %401 = vmatprep.subr.bf16.mxu0 0
    %402 = vmatpush1.bf16.msra.mxu0 0
    %403 = vmatprep.subr.bf16.mxu0 0
    %404 = vmatpush1.bf16.msra.mxu0 0
    %405 = vmatprep.subr.bf16.mxu0 0
    %406 = vmatpush1.bf16.msra.mxu0 0
    %407 = vmatprep.subr.bf16.mxu0 0
    %408 = vmatpush1.bf16.msra.mxu0 0
    %409 = vmatprep.mubr.bf16.mxu0 0
    %410 = vmatmul.mubr.bf16.gmra.mrb[0].mxu0 %v268
    %v411 = vpop.f32.mrb[0].mxu0
    %v412 = vadd.f32 %v290, %v411
    %v413 = vpop.f32.mrb[0].mxu0
    %v414 = vadd.f32 %v294, %v413
    %v415 = vpop.f32.mrb[0].mxu0
    %v416 = vadd.f32 %v290, %v415
    %v417 = vpop.f32.mrb[0].mxu0
    %v418 = vadd.f32 %v294, %v417
    %419 = vdwg.mxu0
    %v420 = vld [vmem:[#allocation14 + $0x3] sm:$0x3]
    %v421 = vld [vmem:[#allocation14 + $0x5] sm:$0x3]
    %v422 = vmul.f32 %v412, %v142
    %v423 = vmul.f32 %v414, %v142
    %v424 = vmul.f32 %v416, %v143
    %v425 = vmul.f32 %v418, %v143
    %v426 = vadd.f32 %v422, %v424
    %v427 = vrot.slane %v426, 4
    %v428 = vadd.f32 %v426, %v427
    %v429 = vrot.slane %v428, 2
    %v430 = vadd.f32 %v428, %v429
    %v431 = vrot.slane %v430, 1
    %v432 = vadd.f32 %v430, %v431
    %v433 = vadd.f32 %v423, %v425
    %v434 = vrot.slane %v433, 4
    %v435 = vadd.f32 %v433, %v434
    %v436 = vrot.slane %v435, 2
    %v437 = vadd.f32 %v435, %v436
    %v438 = vrot.slane %v437, 1
    %v439 = vadd.f32 %v437, %v438
    %v440 = vmul.f32 %v422, %v422
    %v441 = vmul.f32 %v423, %v423
    %v442 = vmul.f32 %v424, %v424
    %v443 = vmul.f32 %v425, %v425
    %v444 = vadd.f32 %v440, %v442
    %v445 = vrot.slane %v444, 4
    %v446 = vadd.f32 %v444, %v445
    %v447 = vrot.slane %v446, 2
    %v448 = vadd.f32 %v446, %v447
    %v449 = vrot.slane %v448, 1
    %v450 = vadd.f32 %v448, %v449
    %v451 = vadd.f32 %v441, %v443
    %v452 = vrot.slane %v451, 4
    %v453 = vadd.f32 %v451, %v452
    %v454 = vrot.slane %v453, 2
    %v455 = vadd.f32 %v453, %v454
    %v456 = vrot.slane %v455, 1
    %v457 = vadd.f32 %v455, %v456
    %v458 = vmul.f32 %v432, 0.125
    %v459 = vmul.f32 %v439, 0.125
    %v460 = vmul.f32 %v450, 0.125
    %v461 = vmul.f32 %v457, 0.125
    %v462 = vmul.f32 %v458, %v458
    %v463 = vmul.f32 %v459, %v459
    %v464 = vsub.f32 %v460, %v462
    %v465 = vsub.f32 %v461, %v463
    %v466 = vmax.f32 %v464, 0.0
    %v467 = vmax.f32 %v465, 0.0
    %v468 = vadd.f32 %v466, 0.8
    %v469 = vadd.f32 %v467, 0.8
    %v470 = vrsqrt.pop %v468
    %v471 = vrsqrt.pop %v469
    %v474 = vcombine.low %v470, %v471
    %v476 = vunpack.c.l.s4 1966171168
    %v477 = vunpack.c.0.s8 %v476
    %v478 = vlaneseq
    %v479 = vshrl.u32 %v478, 7
    %v480 = vsub.s32 %v477, %v479
    %v481 = vrot.slane %v474, %v480
    %v483 = vunpack.c.l.s4 1966171168
    %v484 = vunpack.c.0.s8 %v483
    %v485 = vlaneseq
    %v486 = vshrl.u32 %v485, 7
    %v487 = vsub.s32 %v484, %v486
    %v488 = vrot.slane %v481, %v487
    %v490 = vmul.f32 %v420, %v488
    %v492 = vlaneseq
    %v493 = vshrl.u32 %v492, 7
    %v494 = vsub.s32 0, %v493
    %v495 = vrot.slane %v490, %v494
    %v496 = vlaneseq
    %v497 = vshrl.u32 %v496, 7
    %v498 = vsub.s32 1, %v497
    %v499 = vrot.slane %v490, %v498
    %v502 = vmul.f32 %v458, %v495
    %v503 = vmul.f32 %v459, %v499
    %v506 = vcombine.low %v502, %v503
    %v508 = vunpack.c.l.s4 1966171168
    %v509 = vunpack.c.0.s8 %v508
    %v510 = vlaneseq
    %v511 = vshrl.u32 %v510, 7
    %v512 = vsub.s32 %v509, %v511
    %v513 = vrot.slane %v506, %v512
    %v515 = vunpack.c.l.s4 1966171168
    %v516 = vunpack.c.0.s8 %v515
    %v517 = vlaneseq
    %v518 = vshrl.u32 %v517, 7
    %v519 = vsub.s32 %v516, %v518
    %v520 = vrot.slane %v513, %v519
    %v522 = vsub.f32 %v421, %v520
    %v523 = vmul.f32 %v412, %v495
    %v524 = vmul.f32 %v414, %v499
    %v525 = vmul.f32 %v416, %v495
    %v526 = vmul.f32 %v418, %v499
    %v528 = vlaneseq
    %v529 = vshrl.u32 %v528, 7
    %v530 = vsub.s32 0, %v529
    %v531 = vrot.slane %v522, %v530
    %v532 = vlaneseq
    %v533 = vshrl.u32 %v532, 7
    %v534 = vsub.s32 1, %v533
    %v535 = vrot.slane %v522, %v534
    %v538 = vadd.f32 %v523, %v531
    %v539 = vadd.f32 %v524, %v535
    %v540 = vadd.f32 %v525, %v531
    %v541 = vadd.f32 %v526, %v535
    %v542 = vmul.f32 %v538, 0.2
    %v543 = vmul.f32 %v539, 0.2
    %v544 = vmul.f32 %v540, 0.2
    %v545 = vmul.f32 %v541, 0.2
    %v546 = vmax.f32 %v538, %v542
    %v547 = vmax.f32 %v539, %v543
    %v548 = vmax.f32 %v540, %v544
    %v549 = vmax.f32 %v541, %v545
    %v550 = vpack.c.bf16 %v548, %v546
    %v551 = vpack.c.bf16 %v549, %v547
    %v552 = vld [vmem:[#allocation12] sm:$0xff]
    %v553 = vld [vmem:[#allocation12 + $0x8] sm:$0xff]
    %v554 = vld [vmem:[#allocation12 + $0x10] sm:$0xff]
    %v555 = vld [vmem:[#allocation12 + $0x18] sm:$0xff]
    %v556 = vld [vmem:[#allocation12 + $0x20] sm:$0xff]
    %v557 = vld [vmem:[#allocation12 + $0x28] sm:$0xff]
    %v558 = vld [vmem:[#allocation12 + $0x30] sm:$0xff]
    %v559 = vld [vmem:[#allocation12 + $0x38] sm:$0xff]
    %v560 = vld [vmem:[#allocation12 + $0x40] sm:$0xff]
    %v561 = vld [vmem:[#allocation12 + $0x48] sm:$0xff]
    %v562 = vld [vmem:[#allocation12 + $0x50] sm:$0xff]
    %v563 = vld [vmem:[#allocation12 + $0x58] sm:$0xff]
    %v564 = vld [vmem:[#allocation12 + $0x60] sm:$0xff]
    %v565 = vld [vmem:[#allocation12 + $0x68] sm:$0xff]
    %v566 = vld [vmem:[#allocation12 + $0x70] sm:$0xff]
    %v567 = vld [vmem:[#allocation12 + $0x78] sm:$0xff]
    %v568 = vld [vmem:[#allocation12 + $0x80] sm:$0xff]
    %v569 = vld [vmem:[#allocation12 + $0x88] sm:$0xff]
    %v570 = vld [vmem:[#allocation12 + $0x90] sm:$0xff]
    %v571 = vld [vmem:[#allocation12 + $0x98] sm:$0xff]
    %v572 = vld [vmem:[#allocation12 + $0xa0] sm:$0xff]
    %v573 = vld [vmem:[#allocation12 + $0xa8] sm:$0xff]
    %v574 = vld [vmem:[#allocation12 + $0xb0] sm:$0xff]
    %v575 = vld [vmem:[#allocation12 + $0xb8] sm:$0xff]
    %v576 = vld [vmem:[#allocation12 + $0xc0] sm:$0xff]
    %v577 = vld [vmem:[#allocation12 + $0xc8] sm:$0xff]
    %v578 = vld [vmem:[#allocation12 + $0xd0] sm:$0xff]
    %v579 = vld [vmem:[#allocation12 + $0xd8] sm:$0xff]
    %v580 = vld [vmem:[#allocation12 + $0xe0] sm:$0xff]
    %v581 = vld [vmem:[#allocation12 + $0xe8] sm:$0xff]
    %v582 = vld [vmem:[#allocation12 + $0xf0] sm:$0xff]
    %v583 = vld [vmem:[#allocation12 + $0xf8] sm:$0xff]
    %v584 = vld [vmem:[#allocation12 + $0x100] sm:$0xff]
    %v585 = vld [vmem:[#allocation12 + $0x108] sm:$0xff]
    %v586 = vld [vmem:[#allocation12 + $0x110] sm:$0xff]
    %v587 = vld [vmem:[#allocation12 + $0x118] sm:$0xff]
    %v588 = vld [vmem:[#allocation12 + $0x120] sm:$0xff]
    %v589 = vld [vmem:[#allocation12 + $0x128] sm:$0xff]
    %v590 = vld [vmem:[#allocation12 + $0x130] sm:$0xff]
    %v591 = vld [vmem:[#allocation12 + $0x138] sm:$0xff]
    %v592 = vld [vmem:[#allocation12 + $0x140] sm:$0xff]
    %v593 = vld [vmem:[#allocation12 + $0x148] sm:$0xff]
    %v594 = vld [vmem:[#allocation12 + $0x150] sm:$0xff]
    %v595 = vld [vmem:[#allocation12 + $0x158] sm:$0xff]
    %v596 = vld [vmem:[#allocation12 + $0x160] sm:$0xff]
    %v597 = vld [vmem:[#allocation12 + $0x168] sm:$0xff]
    %v598 = vld [vmem:[#allocation12 + $0x170] sm:$0xff]
    %v599 = vld [vmem:[#allocation12 + $0x178] sm:$0xff]
    %v600 = vld [vmem:[#allocation12 + $0x180] sm:$0xff]
    %v601 = vld [vmem:[#allocation12 + $0x188] sm:$0xff]
    %v602 = vld [vmem:[#allocation12 + $0x190] sm:$0xff]
    %v603 = vld [vmem:[#allocation12 + $0x198] sm:$0xff]
    %v604 = vld [vmem:[#allocation12 + $0x1a0] sm:$0xff]
    %v605 = vld [vmem:[#allocation12 + $0x1a8] sm:$0xff]
    %v606 = vld [vmem:[#allocation12 + $0x1b0] sm:$0xff]
    %v607 = vld [vmem:[#allocation12 + $0x1b8] sm:$0xff]
    %v608 = vld [vmem:[#allocation12 + $0x1c0] sm:$0xff]
    %v609 = vld [vmem:[#allocation12 + $0x1c8] sm:$0xff]
    %v610 = vld [vmem:[#allocation12 + $0x1d0] sm:$0xff]
    %v611 = vld [vmem:[#allocation12 + $0x1d8] sm:$0xff]
    %v612 = vld [vmem:[#allocation12 + $0x1e0] sm:$0xff]
    %v613 = vld [vmem:[#allocation12 + $0x1e8] sm:$0xff]
    %v614 = vld [vmem:[#allocation12 + $0x1f0] sm:$0xff]
    %v615 = vld [vmem:[#allocation12 + $0x1f8] sm:$0xff]
    %v616 = vld [vmem:[#allocation14 + $0x7] sm:$0xf]
    %v618 = vlaneseq
    %v619 = vshrl.u32 %v618, 7
    %v620 = vsub.s32 0, %v619
    %v621 = vrot.slane %v616, %v620
    %v622 = vlaneseq
    %v623 = vshrl.u32 %v622, 7
    %v624 = vsub.s32 1, %v623
    %v625 = vrot.slane %v616, %v624
    %v626 = vlaneseq
    %v627 = vshrl.u32 %v626, 7
    %v628 = vsub.s32 2, %v627
    %v629 = vrot.slane %v616, %v628
    %v630 = vlaneseq
    %v631 = vshrl.u32 %v630, 7
    %v632 = vsub.s32 3, %v631
    %v633 = vrot.slane %v616, %v632
    %v702 = vunpack.c.l.b16 %v552
    %v703 = vunpack.c.h.b16 %v552
    %v704 = vunpack.c.l.b16 %v553
    %v705 = vunpack.c.h.b16 %v553
    %v706 = vunpack.c.l.b16 %v554
    %v707 = vunpack.c.h.b16 %v554
    %v708 = vunpack.c.l.b16 %v555
    %v709 = vunpack.c.h.b16 %v555
    %v710 = vunpack.c.l.b16 %v556
    %v711 = vunpack.c.h.b16 %v556
    %v712 = vunpack.c.l.b16 %v557
    %v713 = vunpack.c.h.b16 %v557
    %v714 = vunpack.c.l.b16 %v558
    %v715 = vunpack.c.h.b16 %v558
    %v716 = vunpack.c.l.b16 %v559
    %v717 = vunpack.c.h.b16 %v559
    %v718 = vunpack.c.l.b16 %v560
    %v719 = vunpack.c.h.b16 %v560
    %v720 = vunpack.c.l.b16 %v561
    %v721 = vunpack.c.h.b16 %v561
    %v722 = vunpack.c.l.b16 %v562
    %v723 = vunpack.c.h.b16 %v562
    %v724 = vunpack.c.l.b16 %v563
    %v725 = vunpack.c.h.b16 %v563
    %v726 = vunpack.c.l.b16 %v564
    %v727 = vunpack.c.h.b16 %v564
    %v728 = vunpack.c.l.b16 %v565
    %v729 = vunpack.c.h.b16 %v565
    %v730 = vunpack.c.l.b16 %v566
    %v731 = vunpack.c.h.b16 %v566
    %v732 = vunpack.c.l.b16 %v567
    %v733 = vunpack.c.h.b16 %v567
    %v734 = vunpack.c.l.b16 %v568
    %v735 = vunpack.c.h.b16 %v568
    %v736 = vunpack.c.l.b16 %v569
    %v737 = vunpack.c.h.b16 %v569
    %v738 = vunpack.c.l.b16 %v570
    %v739 = vunpack.c.h.b16 %v570
    %v740 = vunpack.c.l.b16 %v571
    %v741 = vunpack.c.h.b16 %v571
    %v742 = vunpack.c.l.b16 %v572
    %v743 = vunpack.c.h.b16 %v572
    %v744 = vunpack.c.l.b16 %v573
    %v745 = vunpack.c.h.b16 %v573
    %v746 = vunpack.c.l.b16 %v574
    %v747 = vunpack.c.h.b16 %v574
    %v748 = vunpack.c.l.b16 %v575
    %v749 = vunpack.c.h.b16 %v575
    %v750 = vunpack.c.l.b16 %v576
    %v751 = vunpack.c.h.b16 %v576
    %v752 = vunpack.c.l.b16 %v577
    %v753 = vunpack.c.h.b16 %v577
    %v754 = vunpack.c.l.b16 %v578
    %v755 = vunpack.c.h.b16 %v578
    %v756 = vunpack.c.l.b16 %v579
    %v757 = vunpack.c.h.b16 %v579
    %v758 = vunpack.c.l.b16 %v580
    %v759 = vunpack.c.h.b16 %v580
    %v760 = vunpack.c.l.b16 %v581
    %v761 = vunpack.c.h.b16 %v581
    %v762 = vunpack.c.l.b16 %v582
    %v763 = vunpack.c.h.b16 %v582
    %v764 = vunpack.c.l.b16 %v583
    %v765 = vunpack.c.h.b16 %v583
    %v766 = vunpack.c.l.b16 %v584
    %v767 = vunpack.c.h.b16 %v584
    %v768 = vunpack.c.l.b16 %v585
    %v769 = vunpack.c.h.b16 %v585
    %v770 = vunpack.c.l.b16 %v586
    %v771 = vunpack.c.h.b16 %v586
    %v772 = vunpack.c.l.b16 %v587
    %v773 = vunpack.c.h.b16 %v587
    %v774 = vunpack.c.l.b16 %v588
    %v775 = vunpack.c.h.b16 %v588
    %v776 = vunpack.c.l.b16 %v589
    %v777 = vunpack.c.h.b16 %v589
    %v778 = vunpack.c.l.b16 %v590
    %v779 = vunpack.c.h.b16 %v590
    %v780 = vunpack.c.l.b16 %v591
    %v781 = vunpack.c.h.b16 %v591
    %v782 = vunpack.c.l.b16 %v592
    %v783 = vunpack.c.h.b16 %v592
    %v784 = vunpack.c.l.b16 %v593
    %v785 = vunpack.c.h.b16 %v593
    %v786 = vunpack.c.l.b16 %v594
    %v787 = vunpack.c.h.b16 %v594
    %v788 = vunpack.c.l.b16 %v595
    %v789 = vunpack.c.h.b16 %v595
    %v790 = vunpack.c.l.b16 %v596
    %v791 = vunpack.c.h.b16 %v596
    %v792 = vunpack.c.l.b16 %v597
    %v793 = vunpack.c.h.b16 %v597
    %v794 = vunpack.c.l.b16 %v598
    %v795 = vunpack.c.h.b16 %v598
    %v796 = vunpack.c.l.b16 %v599
    %v797 = vunpack.c.h.b16 %v599
    %v798 = vunpack.c.l.b16 %v600
    %v799 = vunpack.c.h.b16 %v600
    %v800 = vunpack.c.l.b16 %v601
    %v801 = vunpack.c.h.b16 %v601
    %v802 = vunpack.c.l.b16 %v602
    %v803 = vunpack.c.h.b16 %v602
    %v804 = vunpack.c.l.b16 %v603
    %v805 = vunpack.c.h.b16 %v603
    %v806 = vunpack.c.l.b16 %v604
    %v807 = vunpack.c.h.b16 %v604
    %v808 = vunpack.c.l.b16 %v605
    %v809 = vunpack.c.h.b16 %v605
    %v810 = vunpack.c.l.b16 %v606
    %v811 = vunpack.c.h.b16 %v606
    %v812 = vunpack.c.l.b16 %v607
    %v813 = vunpack.c.h.b16 %v607
    %v814 = vunpack.c.l.b16 %v608
    %v815 = vunpack.c.h.b16 %v608
    %v816 = vunpack.c.l.b16 %v609
    %v817 = vunpack.c.h.b16 %v609
    %v818 = vunpack.c.l.b16 %v610
    %v819 = vunpack.c.h.b16 %v610
    %v820 = vunpack.c.l.b16 %v611
    %v821 = vunpack.c.h.b16 %v611
    %v822 = vunpack.c.l.b16 %v612
    %v823 = vunpack.c.h.b16 %v612
    %v824 = vunpack.c.l.b16 %v613
    %v825 = vunpack.c.h.b16 %v613
    %v826 = vunpack.c.l.b16 %v614
    %v827 = vunpack.c.h.b16 %v614
    %v828 = vunpack.c.l.b16 %v615
    %v829 = vunpack.c.h.b16 %v615
    %v830 = vpack.c.b16 %v706, %v702
    %v831 = vpack.c.b16 %v707, %v703
    %v832 = vpack.c.b16 %v708, %v704
    %v833 = vpack.c.b16 %v709, %v705
    %v834 = vpack.c.b16 %v714, %v710
    %v835 = vpack.c.b16 %v715, %v711
    %v836 = vpack.c.b16 %v716, %v712
    %v837 = vpack.c.b16 %v717, %v713
    %v838 = vpack.c.b16 %v722, %v718
    %v839 = vpack.c.b16 %v723, %v719
    %v840 = vpack.c.b16 %v724, %v720
    %v841 = vpack.c.b16 %v725, %v721
    %v842 = vpack.c.b16 %v730, %v726
    %v843 = vpack.c.b16 %v731, %v727
    %v844 = vpack.c.b16 %v732, %v728
    %v845 = vpack.c.b16 %v733, %v729
    %v846 = vpack.c.b16 %v738, %v734
    %v847 = vpack.c.b16 %v739, %v735
    %v848 = vpack.c.b16 %v740, %v736
    %v849 = vpack.c.b16 %v741, %v737
    %v850 = vpack.c.b16 %v746, %v742
    %v851 = vpack.c.b16 %v747, %v743
    %v852 = vpack.c.b16 %v748, %v744
    %v853 = vpack.c.b16 %v749, %v745
    %v854 = vpack.c.b16 %v754, %v750
    %v855 = vpack.c.b16 %v755, %v751
    %v856 = vpack.c.b16 %v756, %v752
    %v857 = vpack.c.b16 %v757, %v753
    %v858 = vpack.c.b16 %v762, %v758
    %v859 = vpack.c.b16 %v763, %v759
    %v860 = vpack.c.b16 %v764, %v760
    %v861 = vpack.c.b16 %v765, %v761
    %v862 = vpack.c.b16 %v770, %v766
    %v863 = vpack.c.b16 %v771, %v767
    %v864 = vpack.c.b16 %v772, %v768
    %v865 = vpack.c.b16 %v773, %v769
    %v866 = vpack.c.b16 %v778, %v774
    %v867 = vpack.c.b16 %v779, %v775
    %v868 = vpack.c.b16 %v780, %v776
    %v869 = vpack.c.b16 %v781, %v777
    %v870 = vpack.c.b16 %v786, %v782
    %v871 = vpack.c.b16 %v787, %v783
    %v872 = vpack.c.b16 %v788, %v784
    %v873 = vpack.c.b16 %v789, %v785
    %v874 = vpack.c.b16 %v794, %v790
    %v875 = vpack.c.b16 %v795, %v791
    %v876 = vpack.c.b16 %v796, %v792
    %v877 = vpack.c.b16 %v797, %v793
    %v878 = vpack.c.b16 %v802, %v798
    %v879 = vpack.c.b16 %v803, %v799
    %v880 = vpack.c.b16 %v804, %v800
    %v881 = vpack.c.b16 %v805, %v801
    %v882 = vpack.c.b16 %v810, %v806
    %v883 = vpack.c.b16 %v811, %v807
    %v884 = vpack.c.b16 %v812, %v808
    %v885 = vpack.c.b16 %v813, %v809
    %v886 = vpack.c.b16 %v818, %v814
    %v887 = vpack.c.b16 %v819, %v815
    %v888 = vpack.c.b16 %v820, %v816
    %v889 = vpack.c.b16 %v821, %v817
    %v890 = vpack.c.b16 %v826, %v822
    %v891 = vpack.c.b16 %v827, %v823
    %v892 = vpack.c.b16 %v828, %v824
    %v893 = vpack.c.b16 %v829, %v825
    %958 = vmatprep.subr.bf16.mxu0 %v831
    %959 = vmatpush1.bf16.msra.mxu0 %v830
    %960 = vmatprep.subr.bf16.mxu0 %v835
    %961 = vmatpush1.bf16.msra.mxu0 %v834
    %962 = vmatprep.subr.bf16.mxu0 %v839
    %963 = vmatpush1.bf16.msra.mxu0 %v838
    %964 = vmatprep.subr.bf16.mxu0 %v843
    %965 = vmatpush1.bf16.msra.mxu0 %v842
    %966 = vmatprep.subr.bf16.mxu0 %v847
    %967 = vmatpush1.bf16.msra.mxu0 %v846
    %968 = vmatprep.subr.bf16.mxu0 %v851
    %969 = vmatpush1.bf16.msra.mxu0 %v850
    %970 = vmatprep.subr.bf16.mxu0 %v855
    %971 = vmatpush1.bf16.msra.mxu0 %v854
    %972 = vmatprep.subr.bf16.mxu0 %v859
    %973 = vmatpush1.bf16.msra.mxu0 %v858
    %974 = vmatprep.subr.bf16.mxu0 %v863
    %975 = vmatpush1.bf16.msra.mxu0 %v862
    %976 = vmatprep.subr.bf16.mxu0 %v867
    %977 = vmatpush1.bf16.msra.mxu0 %v866
    %978 = vmatprep.subr.bf16.mxu0 %v871
    %979 = vmatpush1.bf16.msra.mxu0 %v870
    %980 = vmatprep.subr.bf16.mxu0 %v875
    %981 = vmatpush1.bf16.msra.mxu0 %v874
    %982 = vmatprep.subr.bf16.mxu0 %v879
    %983 = vmatpush1.bf16.msra.mxu0 %v878
    %984 = vmatprep.subr.bf16.mxu0 %v883
    %985 = vmatpush1.bf16.msra.mxu0 %v882
    %986 = vmatprep.subr.bf16.mxu0 %v887
    %987 = vmatpush1.bf16.msra.mxu0 %v886
    %988 = vmatprep.subr.bf16.mxu0 %v891
    %989 = vmatpush1.bf16.msra.mxu0 %v890
    %990 = vmatprep.mubr.bf16.mxu0 %v551
    %991 = vmatmul.mubr.bf16.gmra.mrb[0].mxu0 %v550
    %v992 = vpop.f32.mrb[0].mxu0
    %v993 = vadd.f32 %v621, %v992
    %v994 = vpop.f32.mrb[0].mxu0
    %v995 = vadd.f32 %v625, %v994
    %v996 = vpop.f32.mrb[0].mxu0
    %v997 = vadd.f32 %v621, %v996
    %v998 = vpop.f32.mrb[0].mxu0
    %v999 = vadd.f32 %v625, %v998
    %1000 = vdwg.mxu0
    %1001 = vmatprep.subr.bf16.mxu0 %v833
    %1002 = vmatpush1.bf16.msra.mxu0 %v832
    %1003 = vmatprep.subr.bf16.mxu0 %v837
    %1004 = vmatpush1.bf16.msra.mxu0 %v836
    %1005 = vmatprep.subr.bf16.mxu0 %v841
    %1006 = vmatpush1.bf16.msra.mxu0 %v840
    %1007 = vmatprep.subr.bf16.mxu0 %v845
    %1008 = vmatpush1.bf16.msra.mxu0 %v844
    %1009 = vmatprep.subr.bf16.mxu0 %v849
    %1010 = vmatpush1.bf16.msra.mxu0 %v848
    %1011 = vmatprep.subr.bf16.mxu0 %v853
    %1012 = vmatpush1.bf16.msra.mxu0 %v852
    %1013 = vmatprep.subr.bf16.mxu0 %v857
    %1014 = vmatpush1.bf16.msra.mxu0 %v856
    %1015 = vmatprep.subr.bf16.mxu0 %v861
    %1016 = vmatpush1.bf16.msra.mxu0 %v860
    %1017 = vmatprep.subr.bf16.mxu0 %v865
    %1018 = vmatpush1.bf16.msra.mxu0 %v864
    %1019 = vmatprep.subr.bf16.mxu0 %v869
    %1020 = vmatpush1.bf16.msra.mxu0 %v868
    %1021 = vmatprep.subr.bf16.mxu0 %v873
    %1022 = vmatpush1.bf16.msra.mxu0 %v872
    %1023 = vmatprep.subr.bf16.mxu0 %v877
    %1024 = vmatpush1.bf16.msra.mxu0 %v876
    %1025 = vmatprep.subr.bf16.mxu0 %v881
    %1026 = vmatpush1.bf16.msra.mxu0 %v880
    %1027 = vmatprep.subr.bf16.mxu0 %v885
    %1028 = vmatpush1.bf16.msra.mxu0 %v884
    %1029 = vmatprep.subr.bf16.mxu0 %v889
    %1030 = vmatpush1.bf16.msra.mxu0 %v888
    %1031 = vmatprep.subr.bf16.mxu0 %v893
    %1032 = vmatpush1.bf16.msra.mxu0 %v892
    %1033 = vmatprep.mubr.bf16.mxu0 %v551
    %1034 = vmatmul.mubr.bf16.gmra.mrb[0].mxu0 %v550
    %v1035 = vpop.f32.mrb[0].mxu0
    %v1036 = vadd.f32 %v629, %v1035
    %v1037 = vpop.f32.mrb[0].mxu0
    %v1038 = vadd.f32 %v633, %v1037
    %v1039 = vpop.f32.mrb[0].mxu0
    %v1040 = vadd.f32 %v629, %v1039
    %v1041 = vpop.f32.mrb[0].mxu0
    %v1042 = vadd.f32 %v633, %v1041
    %1043 = vdwg.mxu0
    %v1044 = vld [vmem:[#allocation14 + $0xb] sm:$0xf]
    %v1045 = vld [vmem:[#allocation14 + $0xf] sm:$0xf]
    %v1046 = vmul.f32 %v993, %v142
    %v1047 = vmul.f32 %v995, %v142
    %v1048 = vmul.f32 %v1036, %v142
    %v1049 = vmul.f32 %v1038, %v142
    %v1050 = vmul.f32 %v997, %v143
    %v1051 = vmul.f32 %v999, %v143
    %v1052 = vmul.f32 %v1040, %v143
    %v1053 = vmul.f32 %v1042, %v143
    %v1054 = vadd.f32 %v1046, %v1050
    %v1055 = vrot.slane %v1054, 4
    %v1056 = vadd.f32 %v1054, %v1055
    %v1057 = vrot.slane %v1056, 2
    %v1058 = vadd.f32 %v1056, %v1057
    %v1059 = vrot.slane %v1058, 1
    %v1060 = vadd.f32 %v1058, %v1059
    %v1061 = vadd.f32 %v1047, %v1051
    %v1062 = vrot.slane %v1061, 4
    %v1063 = vadd.f32 %v1061, %v1062
    %v1064 = vrot.slane %v1063, 2
    %v1065 = vadd.f32 %v1063, %v1064
    %v1066 = vrot.slane %v1065, 1
    %v1067 = vadd.f32 %v1065, %v1066
    %v1068 = vadd.f32 %v1048, %v1052
    %v1069 = vrot.slane %v1068, 4
    %v1070 = vadd.f32 %v1068, %v1069
    %v1071 = vrot.slane %v1070, 2
    %v1072 = vadd.f32 %v1070, %v1071
    %v1073 = vrot.slane %v1072, 1
    %v1074 = vadd.f32 %v1072, %v1073
    %v1075 = vadd.f32 %v1049, %v1053
    %v1076 = vrot.slane %v1075, 4
    %v1077 = vadd.f32 %v1075, %v1076
    %v1078 = vrot.slane %v1077, 2
    %v1079 = vadd.f32 %v1077, %v1078
    %v1080 = vrot.slane %v1079, 1
    %v1081 = vadd.f32 %v1079, %v1080
    %v1082 = vmul.f32 %v1046, %v1046
    %v1083 = vmul.f32 %v1047, %v1047
    %v1084 = vmul.f32 %v1048, %v1048
    %v1085 = vmul.f32 %v1049, %v1049
    %v1086 = vmul.f32 %v1050, %v1050
    %v1087 = vmul.f32 %v1051, %v1051
    %v1088 = vmul.f32 %v1052, %v1052
    %v1089 = vmul.f32 %v1053, %v1053
    %v1090 = vadd.f32 %v1082, %v1086
    %v1091 = vrot.slane %v1090, 4
    %v1092 = vadd.f32 %v1090, %v1091
    %v1093 = vrot.slane %v1092, 2
    %v1094 = vadd.f32 %v1092, %v1093
    %v1095 = vrot.slane %v1094, 1
    %v1096 = vadd.f32 %v1094, %v1095
    %v1097 = vadd.f32 %v1083, %v1087
    %v1098 = vrot.slane %v1097, 4
    %v1099 = vadd.f32 %v1097, %v1098
    %v1100 = vrot.slane %v1099, 2
    %v1101 = vadd.f32 %v1099, %v1100
    %v1102 = vrot.slane %v1101, 1
    %v1103 = vadd.f32 %v1101, %v1102
    %v1104 = vadd.f32 %v1084, %v1088
    %v1105 = vrot.slane %v1104, 4
    %v1106 = vadd.f32 %v1104, %v1105
    %v1107 = vrot.slane %v1106, 2
    %v1108 = vadd.f32 %v1106, %v1107
    %v1109 = vrot.slane %v1108, 1
    %v1110 = vadd.f32 %v1108, %v1109
    %v1111 = vadd.f32 %v1085, %v1089
    %v1112 = vrot.slane %v1111, 4
    %v1113 = vadd.f32 %v1111, %v1112
    %v1114 = vrot.slane %v1113, 2
    %v1115 = vadd.f32 %v1113, %v1114
    %v1116 = vrot.slane %v1115, 1
    %v1117 = vadd.f32 %v1115, %v1116
    %v1118 = vmul.f32 %v1060, 0.125
    %v1119 = vmul.f32 %v1067, 0.125
    %v1120 = vmul.f32 %v1074, 0.125
    %v1121 = vmul.f32 %v1081, 0.125
    %v1122 = vmul.f32 %v1096, 0.125
    %v1123 = vmul.f32 %v1103, 0.125
    %v1124 = vmul.f32 %v1110, 0.125
    %v1125 = vmul.f32 %v1117, 0.125
    %v1126 = vmul.f32 %v1118, %v1118
    %v1127 = vmul.f32 %v1119, %v1119
    %v1128 = vmul.f32 %v1120, %v1120
    %v1129 = vmul.f32 %v1121, %v1121
    %v1130 = vsub.f32 %v1122, %v1126
    %v1131 = vsub.f32 %v1123, %v1127
    %v1132 = vsub.f32 %v1124, %v1128
    %v1133 = vsub.f32 %v1125, %v1129
    %v1134 = vmax.f32 %v1130, 0.0
    %v1135 = vmax.f32 %v1131, 0.0
    %v1136 = vmax.f32 %v1132, 0.0
    %v1137 = vmax.f32 %v1133, 0.0
    %v1138 = vadd.f32 %v1134, 0.8
    %v1139 = vadd.f32 %v1135, 0.8
    %v1140 = vadd.f32 %v1136, 0.8
    %v1141 = vadd.f32 %v1137, 0.8
    %v1142 = vrsqrt.pop %v1138
    %v1143 = vrsqrt.pop %v1139
    %v1144 = vrsqrt.pop %v1140
    %v1145 = vrsqrt.pop %v1141
    %v1150 = vcombine.low %v1142, %v1143
    %v1151 = vcombine.low %v1144, %v1145
    %v1153 = vunpack.c.l.s4 1966171168
    %v1154 = vunpack.c.0.s8 %v1153
    %v1155 = vlaneseq
    %v1156 = vshrl.u32 %v1155, 7
    %v1157 = vsub.s32 %v1154, %v1156
    %v1158 = vrot.slane %v1150, %v1157
    %v1160 = vunpack.c.l.s4 1966171168
    %v1161 = vunpack.c.0.s8 %v1160
    %v1162 = vlaneseq
    %v1163 = vshrl.u32 %v1162, 7
    %v1164 = vsub.s32 %v1161, %v1163
    %v1165 = vrot.slane %v1151, %v1164
    %v1166 = vcombine.low %v1158, %v1165
    %v1168 = vunpack.c.l.s4 1966171168
    %v1169 = vunpack.c.0.s8 %v1168
    %v1170 = vlaneseq
    %v1171 = vshrl.u32 %v1170, 7
    %v1172 = vsub.s32 %v1169, %v1171
    %v1173 = vrot.slane %v1166, %v1172
    %v1175 = vmul.f32 %v1044, %v1173
    %v1177 = vlaneseq
    %v1178 = vshrl.u32 %v1177, 7
    %v1179 = vsub.s32 0, %v1178
    %v1180 = vrot.slane %v1175, %v1179
    %v1181 = vlaneseq
    %v1182 = vshrl.u32 %v1181, 7
    %v1183 = vsub.s32 1, %v1182
    %v1184 = vrot.slane %v1175, %v1183
    %v1185 = vlaneseq
    %v1186 = vshrl.u32 %v1185, 7
    %v1187 = vsub.s32 2, %v1186
    %v1188 = vrot.slane %v1175, %v1187
    %v1189 = vlaneseq
    %v1190 = vshrl.u32 %v1189, 7
    %v1191 = vsub.s32 3, %v1190
    %v1192 = vrot.slane %v1175, %v1191
    %v1197 = vmul.f32 %v1118, %v1180
    %v1198 = vmul.f32 %v1119, %v1184
    %v1199 = vmul.f32 %v1120, %v1188
    %v1200 = vmul.f32 %v1121, %v1192
    %v1205 = vcombine.low %v1197, %v1198
    %v1206 = vcombine.low %v1199, %v1200
    %v1208 = vunpack.c.l.s4 1966171168
    %v1209 = vunpack.c.0.s8 %v1208
    %v1210 = vlaneseq
    %v1211 = vshrl.u32 %v1210, 7
    %v1212 = vsub.s32 %v1209, %v1211
    %v1213 = vrot.slane %v1205, %v1212
    %v1215 = vunpack.c.l.s4 1966171168
    %v1216 = vunpack.c.0.s8 %v1215
    %v1217 = vlaneseq
    %v1218 = vshrl.u32 %v1217, 7
    %v1219 = vsub.s32 %v1216, %v1218
    %v1220 = vrot.slane %v1206, %v1219
    %v1221 = vcombine.low %v1213, %v1220
    %v1223 = vunpack.c.l.s4 1966171168
    %v1224 = vunpack.c.0.s8 %v1223
    %v1225 = vlaneseq
    %v1226 = vshrl.u32 %v1225, 7
    %v1227 = vsub.s32 %v1224, %v1226
    %v1228 = vrot.slane %v1221, %v1227
    %v1230 = vsub.f32 %v1045, %v1228
    %v1231 = vmul.f32 %v993, %v1180
    %v1232 = vmul.f32 %v995, %v1184
    %v1233 = vmul.f32 %v1036, %v1188
    %v1234 = vmul.f32 %v1038, %v1192
    %v1235 = vmul.f32 %v997, %v1180
    %v1236 = vmul.f32 %v999, %v1184
    %v1237 = vmul.f32 %v1040, %v1188
    %v1238 = vmul.f32 %v1042, %v1192
    %v1240 = vlaneseq
    %v1241 = vshrl.u32 %v1240, 7
    %v1242 = vsub.s32 0, %v1241
    %v1243 = vrot.slane %v1230, %v1242
    %v1244 = vlaneseq
    %v1245 = vshrl.u32 %v1244, 7
    %v1246 = vsub.s32 1, %v1245
    %v1247 = vrot.slane %v1230, %v1246
    %v1248 = vlaneseq
    %v1249 = vshrl.u32 %v1248, 7
    %v1250 = vsub.s32 2, %v1249
    %v1251 = vrot.slane %v1230, %v1250
    %v1252 = vlaneseq
    %v1253 = vshrl.u32 %v1252, 7
    %v1254 = vsub.s32 3, %v1253
    %v1255 = vrot.slane %v1230, %v1254
    %v1260 = vadd.f32 %v1231, %v1243
    %v1261 = vadd.f32 %v1232, %v1247
    %v1262 = vadd.f32 %v1233, %v1251
    %v1263 = vadd.f32 %v1234, %v1255
    %v1264 = vadd.f32 %v1235, %v1243
    %v1265 = vadd.f32 %v1236, %v1247
    %v1266 = vadd.f32 %v1237, %v1251
    %v1267 = vadd.f32 %v1238, %v1255
    %v1268 = vmul.f32 %v1260, 0.2
    %v1269 = vmul.f32 %v1261, 0.2
    %v1270 = vmul.f32 %v1262, 0.2
    %v1271 = vmul.f32 %v1263, 0.2
    %v1272 = vmul.f32 %v1264, 0.2
    %v1273 = vmul.f32 %v1265, 0.2
    %v1274 = vmul.f32 %v1266, 0.2
    %v1275 = vmul.f32 %v1267, 0.2
    %v1276 = vmax.f32 %v1260, %v1268
    %v1277 = vmax.f32 %v1261, %v1269
    %v1278 = vmax.f32 %v1262, %v1270
    %v1279 = vmax.f32 %v1263, %v1271
    %v1280 = vmax.f32 %v1264, %v1272
    %v1281 = vmax.f32 %v1265, %v1273
    %v1282 = vmax.f32 %v1266, %v1274
    %v1283 = vmax.f32 %v1267, %v1275
    %v1284 = vpack.c.bf16 %v1280, %v1276
    %v1285 = vpack.c.bf16 %v1281, %v1277
    %v1286 = vpack.c.bf16 %v1282, %v1278
    %v1287 = vpack.c.bf16 %v1283, %v1279
    %s1288 = smul.u32 4, 64
    %s1289 = smul.u32 %s1288, 8
    %s1290 = sshll.u32 %s1289, 4
    %1291 = dma.done [#allocation5], %s1290
    %v1292 = vld [vmem:[#allocation3] sm:$0xff]
    %v1293 = vld [vmem:[#allocation3 + $0x8] sm:$0xff]
    %v1294 = vld [vmem:[#allocation3 + $0x10] sm:$0xff]
    %v1295 = vld [vmem:[#allocation3 + $0x18] sm:$0xff]
    %v1296 = vld [vmem:[#allocation3 + $0x20] sm:$0xff]
    %v1297 = vld [vmem:[#allocation3 + $0x28] sm:$0xff]
    %v1298 = vld [vmem:[#allocation3 + $0x30] sm:$0xff]
    %v1299 = vld [vmem:[#allocation3 + $0x38] sm:$0xff]
    %v1300 = vld [vmem:[#allocation3 + $0x40] sm:$0xff]
    %v1301 = vld [vmem:[#allocation3 + $0x48] sm:$0xff]
    %v1302 = vld [vmem:[#allocation3 + $0x50] sm:$0xff]
    %v1303 = vld [vmem:[#allocation3 + $0x58] sm:$0xff]
    %v1304 = vld [vmem:[#allocation3 + $0x60] sm:$0xff]
    %v1305 = vld [vmem:[#allocation3 + $0x68] sm:$0xff]
    %v1306 = vld [vmem:[#allocation3 + $0x70] sm:$0xff]
    %v1307 = vld [vmem:[#allocation3 + $0x78] sm:$0xff]
    %v1308 = vld [vmem:[#allocation3 + $0x80] sm:$0xff]
    %v1309 = vld [vmem:[#allocation3 + $0x88] sm:$0xff]
    %v1310 = vld [vmem:[#allocation3 + $0x90] sm:$0xff]
    %v1311 = vld [vmem:[#allocation3 + $0x98] sm:$0xff]
    %v1312 = vld [vmem:[#allocation3 + $0xa0] sm:$0xff]
    %v1313 = vld [vmem:[#allocation3 + $0xa8] sm:$0xff]
    %v1314 = vld [vmem:[#allocation3 + $0xb0] sm:$0xff]
    %v1315 = vld [vmem:[#allocation3 + $0xb8] sm:$0xff]
    %v1316 = vld [vmem:[#allocation3 + $0xc0] sm:$0xff]
    %v1317 = vld [vmem:[#allocation3 + $0xc8] sm:$0xff]
    %v1318 = vld [vmem:[#allocation3 + $0xd0] sm:$0xff]
    %v1319 = vld [vmem:[#allocation3 + $0xd8] sm:$0xff]
    %v1320 = vld [vmem:[#allocation3 + $0xe0] sm:$0xff]
    %v1321 = vld [vmem:[#allocation3 + $0xe8] sm:$0xff]
    %v1322 = vld [vmem:[#allocation3 + $0xf0] sm:$0xff]
    %v1323 = vld [vmem:[#allocation3 + $0xf8] sm:$0xff]
    %v1324 = vld [vmem:[#allocation3 + $0x100] sm:$0xff]
    %v1325 = vld [vmem:[#allocation3 + $0x108] sm:$0xff]
    %v1326 = vld [vmem:[#allocation3 + $0x110] sm:$0xff]
    %v1327 = vld [vmem:[#allocation3 + $0x118] sm:$0xff]
    %v1328 = vld [vmem:[#allocation3 + $0x120] sm:$0xff]
    %v1329 = vld [vmem:[#allocation3 + $0x128] sm:$0xff]
    %v1330 = vld [vmem:[#allocation3 + $0x130] sm:$0xff]
    %v1331 = vld [vmem:[#allocation3 + $0x138] sm:$0xff]
    %v1332 = vld [vmem:[#allocation3 + $0x140] sm:$0xff]
    %v1333 = vld [vmem:[#allocation3 + $0x148] sm:$0xff]
    %v1334 = vld [vmem:[#allocation3 + $0x150] sm:$0xff]
    %v1335 = vld [vmem:[#allocation3 + $0x158] sm:$0xff]
    %v1336 = vld [vmem:[#allocation3 + $0x160] sm:$0xff]
    %v1337 = vld [vmem:[#allocation3 + $0x168] sm:$0xff]
    %v1338 = vld [vmem:[#allocation3 + $0x170] sm:$0xff]
    %v1339 = vld [vmem:[#allocation3 + $0x178] sm:$0xff]
    %v1340 = vld [vmem:[#allocation3 + $0x180] sm:$0xff]
    %v1341 = vld [vmem:[#allocation3 + $0x188] sm:$0xff]
    %v1342 = vld [vmem:[#allocation3 + $0x190] sm:$0xff]
    %v1343 = vld [vmem:[#allocation3 + $0x198] sm:$0xff]
    %v1344 = vld [vmem:[#allocation3 + $0x1a0] sm:$0xff]
    %v1345 = vld [vmem:[#allocation3 + $0x1a8] sm:$0xff]
    %v1346 = vld [vmem:[#allocation3 + $0x1b0] sm:$0xff]
    %v1347 = vld [vmem:[#allocation3 + $0x1b8] sm:$0xff]
    %v1348 = vld [vmem:[#allocation3 + $0x1c0] sm:$0xff]
    %v1349 = vld [vmem:[#allocation3 + $0x1c8] sm:$0xff]
    %v1350 = vld [vmem:[#allocation3 + $0x1d0] sm:$0xff]
    %v1351 = vld [vmem:[#allocation3 + $0x1d8] sm:$0xff]
    %v1352 = vld [vmem:[#allocation3 + $0x1e0] sm:$0xff]
    %v1353 = vld [vmem:[#allocation3 + $0x1e8] sm:$0xff]
    %v1354 = vld [vmem:[#allocation3 + $0x1f0] sm:$0xff]
    %v1355 = vld [vmem:[#allocation3 + $0x1f8] sm:$0xff]
    %v1356 = vld [vmem:[#allocation3 + $0x200] sm:$0xff]
    %v1357 = vld [vmem:[#allocation3 + $0x208] sm:$0xff]
    %v1358 = vld [vmem:[#allocation3 + $0x210] sm:$0xff]
    %v1359 = vld [vmem:[#allocation3 + $0x218] sm:$0xff]
    %v1360 = vld [vmem:[#allocation3 + $0x220] sm:$0xff]
    %v1361 = vld [vmem:[#allocation3 + $0x228] sm:$0xff]
    %v1362 = vld [vmem:[#allocation3 + $0x230] sm:$0xff]
    %v1363 = vld [vmem:[#allocation3 + $0x238] sm:$0xff]
    %v1364 = vld [vmem:[#allocation3 + $0x240] sm:$0xff]
    %v1365 = vld [vmem:[#allocation3 + $0x248] sm:$0xff]
    %v1366 = vld [vmem:[#allocation3 + $0x250] sm:$0xff]
    %v1367 = vld [vmem:[#allocation3 + $0x258] sm:$0xff]
    %v1368 = vld [vmem:[#allocation3 + $0x260] sm:$0xff]
    %v1369 = vld [vmem:[#allocation3 + $0x268] sm:$0xff]
    %v1370 = vld [vmem:[#allocation3 + $0x270] sm:$0xff]
    %v1371 = vld [vmem:[#allocation3 + $0x278] sm:$0xff]
    %v1372 = vld [vmem:[#allocation3 + $0x280] sm:$0xff]
    %v1373 = vld [vmem:[#allocation3 + $0x288] sm:$0xff]
    %v1374 = vld [vmem:[#allocation3 + $0x290] sm:$0xff]
    %v1375 = vld [vmem:[#allocation3 + $0x298] sm:$0xff]
    %v1376 = vld [vmem:[#allocation3 + $0x2a0] sm:$0xff]
    %v1377 = vld [vmem:[#allocation3 + $0x2a8] sm:$0xff]
    %v1378 = vld [vmem:[#allocation3 + $0x2b0] sm:$0xff]
    %v1379 = vld [vmem:[#allocation3 + $0x2b8] sm:$0xff]
    %v1380 = vld [vmem:[#allocation3 + $0x2c0] sm:$0xff]
    %v1381 = vld [vmem:[#allocation3 + $0x2c8] sm:$0xff]
    %v1382 = vld [vmem:[#allocation3 + $0x2d0] sm:$0xff]
    %v1383 = vld [vmem:[#allocation3 + $0x2d8] sm:$0xff]
    %v1384 = vld [vmem:[#allocation3 + $0x2e0] sm:$0xff]
    %v1385 = vld [vmem:[#allocation3 + $0x2e8] sm:$0xff]
    %v1386 = vld [vmem:[#allocation3 + $0x2f0] sm:$0xff]
    %v1387 = vld [vmem:[#allocation3 + $0x2f8] sm:$0xff]
    %v1388 = vld [vmem:[#allocation3 + $0x300] sm:$0xff]
    %v1389 = vld [vmem:[#allocation3 + $0x308] sm:$0xff]
    %v1390 = vld [vmem:[#allocation3 + $0x310] sm:$0xff]
    %v1391 = vld [vmem:[#allocation3 + $0x318] sm:$0xff]
    %v1392 = vld [vmem:[#allocation3 + $0x320] sm:$0xff]
    %v1393 = vld [vmem:[#allocation3 + $0x328] sm:$0xff]
    %v1394 = vld [vmem:[#allocation3 + $0x330] sm:$0xff]
    %v1395 = vld [vmem:[#allocation3 + $0x338] sm:$0xff]
    %v1396 = vld [vmem:[#allocation3 + $0x340] sm:$0xff]
    %v1397 = vld [vmem:[#allocation3 + $0x348] sm:$0xff]
    %v1398 = vld [vmem:[#allocation3 + $0x350] sm:$0xff]
    %v1399 = vld [vmem:[#allocation3 + $0x358] sm:$0xff]
    %v1400 = vld [vmem:[#allocation3 + $0x360] sm:$0xff]
    %v1401 = vld [vmem:[#allocation3 + $0x368] sm:$0xff]
    %v1402 = vld [vmem:[#allocation3 + $0x370] sm:$0xff]
    %v1403 = vld [vmem:[#allocation3 + $0x378] sm:$0xff]
    %v1404 = vld [vmem:[#allocation3 + $0x380] sm:$0xff]
    %v1405 = vld [vmem:[#allocation3 + $0x388] sm:$0xff]
    %v1406 = vld [vmem:[#allocation3 + $0x390] sm:$0xff]
    %v1407 = vld [vmem:[#allocation3 + $0x398] sm:$0xff]
    %v1408 = vld [vmem:[#allocation3 + $0x3a0] sm:$0xff]
    %v1409 = vld [vmem:[#allocation3 + $0x3a8] sm:$0xff]
    %v1410 = vld [vmem:[#allocation3 + $0x3b0] sm:$0xff]
    %v1411 = vld [vmem:[#allocation3 + $0x3b8] sm:$0xff]
    %v1412 = vld [vmem:[#allocation3 + $0x3c0] sm:$0xff]
    %v1413 = vld [vmem:[#allocation3 + $0x3c8] sm:$0xff]
    %v1414 = vld [vmem:[#allocation3 + $0x3d0] sm:$0xff]
    %v1415 = vld [vmem:[#allocation3 + $0x3d8] sm:$0xff]
    %v1416 = vld [vmem:[#allocation3 + $0x3e0] sm:$0xff]
    %v1417 = vld [vmem:[#allocation3 + $0x3e8] sm:$0xff]
    %v1418 = vld [vmem:[#allocation3 + $0x3f0] sm:$0xff]
    %v1419 = vld [vmem:[#allocation3 + $0x3f8] sm:$0xff]
    %v1420 = vld [vmem:[#allocation3 + $0x400] sm:$0xff]
    %v1421 = vld [vmem:[#allocation3 + $0x408] sm:$0xff]
    %v1422 = vld [vmem:[#allocation3 + $0x410] sm:$0xff]
    %v1423 = vld [vmem:[#allocation3 + $0x418] sm:$0xff]
    %v1424 = vld [vmem:[#allocation3 + $0x420] sm:$0xff]
    %v1425 = vld [vmem:[#allocation3 + $0x428] sm:$0xff]
    %v1426 = vld [vmem:[#allocation3 + $0x430] sm:$0xff]
    %v1427 = vld [vmem:[#allocation3 + $0x438] sm:$0xff]
    %v1428 = vld [vmem:[#allocation3 + $0x440] sm:$0xff]
    %v1429 = vld [vmem:[#allocation3 + $0x448] sm:$0xff]
    %v1430 = vld [vmem:[#allocation3 + $0x450] sm:$0xff]
    %v1431 = vld [vmem:[#allocation3 + $0x458] sm:$0xff]
    %v1432 = vld [vmem:[#allocation3 + $0x460] sm:$0xff]
    %v1433 = vld [vmem:[#allocation3 + $0x468] sm:$0xff]
    %v1434 = vld [vmem:[#allocation3 + $0x470] sm:$0xff]
    %v1435 = vld [vmem:[#allocation3 + $0x478] sm:$0xff]
    %v1436 = vld [vmem:[#allocation3 + $0x480] sm:$0xff]
    %v1437 = vld [vmem:[#allocation3 + $0x488] sm:$0xff]
    %v1438 = vld [vmem:[#allocation3 + $0x490] sm:$0xff]
    %v1439 = vld [vmem:[#allocation3 + $0x498] sm:$0xff]
    %v1440 = vld [vmem:[#allocation3 + $0x4a0] sm:$0xff]
    %v1441 = vld [vmem:[#allocation3 + $0x4a8] sm:$0xff]
    %v1442 = vld [vmem:[#allocation3 + $0x4b0] sm:$0xff]
    %v1443 = vld [vmem:[#allocation3 + $0x4b8] sm:$0xff]
    %v1444 = vld [vmem:[#allocation3 + $0x4c0] sm:$0xff]
    %v1445 = vld [vmem:[#allocation3 + $0x4c8] sm:$0xff]
    %v1446 = vld [vmem:[#allocation3 + $0x4d0] sm:$0xff]
    %v1447 = vld [vmem:[#allocation3 + $0x4d8] sm:$0xff]
    %v1448 = vld [vmem:[#allocation3 + $0x4e0] sm:$0xff]
    %v1449 = vld [vmem:[#allocation3 + $0x4e8] sm:$0xff]
    %v1450 = vld [vmem:[#allocation3 + $0x4f0] sm:$0xff]
    %v1451 = vld [vmem:[#allocation3 + $0x4f8] sm:$0xff]
    %v1452 = vld [vmem:[#allocation3 + $0x500] sm:$0xff]
    %v1453 = vld [vmem:[#allocation3 + $0x508] sm:$0xff]
    %v1454 = vld [vmem:[#allocation3 + $0x510] sm:$0xff]
    %v1455 = vld [vmem:[#allocation3 + $0x518] sm:$0xff]
    %v1456 = vld [vmem:[#allocation3 + $0x520] sm:$0xff]
    %v1457 = vld [vmem:[#allocation3 + $0x528] sm:$0xff]
    %v1458 = vld [vmem:[#allocation3 + $0x530] sm:$0xff]
    %v1459 = vld [vmem:[#allocation3 + $0x538] sm:$0xff]
    %v1460 = vld [vmem:[#allocation3 + $0x540] sm:$0xff]
    %v1461 = vld [vmem:[#allocation3 + $0x548] sm:$0xff]
    %v1462 = vld [vmem:[#allocation3 + $0x550] sm:$0xff]
    %v1463 = vld [vmem:[#allocation3 + $0x558] sm:$0xff]
    %v1464 = vld [vmem:[#allocation3 + $0x560] sm:$0xff]
    %v1465 = vld [vmem:[#allocation3 + $0x568] sm:$0xff]
    %v1466 = vld [vmem:[#allocation3 + $0x570] sm:$0xff]
    %v1467 = vld [vmem:[#allocation3 + $0x578] sm:$0xff]
    %v1468 = vld [vmem:[#allocation3 + $0x580] sm:$0xff]
    %v1469 = vld [vmem:[#allocation3 + $0x588] sm:$0xff]
    %v1470 = vld [vmem:[#allocation3 + $0x590] sm:$0xff]
    %v1471 = vld [vmem:[#allocation3 + $0x598] sm:$0xff]
    %v1472 = vld [vmem:[#allocation3 + $0x5a0] sm:$0xff]
    %v1473 = vld [vmem:[#allocation3 + $0x5a8] sm:$0xff]
    %v1474 = vld [vmem:[#allocation3 + $0x5b0] sm:$0xff]
    %v1475 = vld [vmem:[#allocation3 + $0x5b8] sm:$0xff]
    %v1476 = vld [vmem:[#allocation3 + $0x5c0] sm:$0xff]
    %v1477 = vld [vmem:[#allocation3 + $0x5c8] sm:$0xff]
    %v1478 = vld [vmem:[#allocation3 + $0x5d0] sm:$0xff]
    %v1479 = vld [vmem:[#allocation3 + $0x5d8] sm:$0xff]
    %v1480 = vld [vmem:[#allocation3 + $0x5e0] sm:$0xff]
    %v1481 = vld [vmem:[#allocation3 + $0x5e8] sm:$0xff]
    %v1482 = vld [vmem:[#allocation3 + $0x5f0] sm:$0xff]
    %v1483 = vld [vmem:[#allocation3 + $0x5f8] sm:$0xff]
    %v1484 = vld [vmem:[#allocation3 + $0x600] sm:$0xff]
    %v1485 = vld [vmem:[#allocation3 + $0x608] sm:$0xff]
    %v1486 = vld [vmem:[#allocation3 + $0x610] sm:$0xff]
    %v1487 = vld [vmem:[#allocation3 + $0x618] sm:$0xff]
    %v1488 = vld [vmem:[#allocation3 + $0x620] sm:$0xff]
    %v1489 = vld [vmem:[#allocation3 + $0x628] sm:$0xff]
    %v1490 = vld [vmem:[#allocation3 + $0x630] sm:$0xff]
    %v1491 = vld [vmem:[#allocation3 + $0x638] sm:$0xff]
    %v1492 = vld [vmem:[#allocation3 + $0x640] sm:$0xff]
    %v1493 = vld [vmem:[#allocation3 + $0x648] sm:$0xff]
    %v1494 = vld [vmem:[#allocation3 + $0x650] sm:$0xff]
    %v1495 = vld [vmem:[#allocation3 + $0x658] sm:$0xff]
    %v1496 = vld [vmem:[#allocation3 + $0x660] sm:$0xff]
    %v1497 = vld [vmem:[#allocation3 + $0x668] sm:$0xff]
    %v1498 = vld [vmem:[#allocation3 + $0x670] sm:$0xff]
    %v1499 = vld [vmem:[#allocation3 + $0x678] sm:$0xff]
    %v1500 = vld [vmem:[#allocation3 + $0x680] sm:$0xff]
    %v1501 = vld [vmem:[#allocation3 + $0x688] sm:$0xff]
    %v1502 = vld [vmem:[#allocation3 + $0x690] sm:$0xff]
    %v1503 = vld [vmem:[#allocation3 + $0x698] sm:$0xff]
    %v1504 = vld [vmem:[#allocation3 + $0x6a0] sm:$0xff]
    %v1505 = vld [vmem:[#allocation3 + $0x6a8] sm:$0xff]
    %v1506 = vld [vmem:[#allocation3 + $0x6b0] sm:$0xff]
    %v1507 = vld [vmem:[#allocation3 + $0x6b8] sm:$0xff]
    %v1508 = vld [vmem:[#allocation3 + $0x6c0] sm:$0xff]
    %v1509 = vld [vmem:[#allocation3 + $0x6c8] sm:$0xff]
    %v1510 = vld [vmem:[#allocation3 + $0x6d0] sm:$0xff]
    %v1511 = vld [vmem:[#allocation3 + $0x6d8] sm:$0xff]
    %v1512 = vld [vmem:[#allocation3 + $0x6e0] sm:$0xff]
    %v1513 = vld [vmem:[#allocation3 + $0x6e8] sm:$0xff]
    %v1514 = vld [vmem:[#allocation3 + $0x6f0] sm:$0xff]
    %v1515 = vld [vmem:[#allocation3 + $0x6f8] sm:$0xff]
    %v1516 = vld [vmem:[#allocation3 + $0x700] sm:$0xff]
    %v1517 = vld [vmem:[#allocation3 + $0x708] sm:$0xff]
    %v1518 = vld [vmem:[#allocation3 + $0x710] sm:$0xff]
    %v1519 = vld [vmem:[#allocation3 + $0x718] sm:$0xff]
    %v1520 = vld [vmem:[#allocation3 + $0x720] sm:$0xff]
    %v1521 = vld [vmem:[#allocation3 + $0x728] sm:$0xff]
    %v1522 = vld [vmem:[#allocation3 + $0x730] sm:$0xff]
    %v1523 = vld [vmem:[#allocation3 + $0x738] sm:$0xff]
    %v1524 = vld [vmem:[#allocation3 + $0x740] sm:$0xff]
    %v1525 = vld [vmem:[#allocation3 + $0x748] sm:$0xff]
    %v1526 = vld [vmem:[#allocation3 + $0x750] sm:$0xff]
    %v1527 = vld [vmem:[#allocation3 + $0x758] sm:$0xff]
    %v1528 = vld [vmem:[#allocation3 + $0x760] sm:$0xff]
    %v1529 = vld [vmem:[#allocation3 + $0x768] sm:$0xff]
    %v1530 = vld [vmem:[#allocation3 + $0x770] sm:$0xff]
    %v1531 = vld [vmem:[#allocation3 + $0x778] sm:$0xff]
    %v1532 = vld [vmem:[#allocation3 + $0x780] sm:$0xff]
    %v1533 = vld [vmem:[#allocation3 + $0x788] sm:$0xff]
    %v1534 = vld [vmem:[#allocation3 + $0x790] sm:$0xff]
    %v1535 = vld [vmem:[#allocation3 + $0x798] sm:$0xff]
    %v1536 = vld [vmem:[#allocation3 + $0x7a0] sm:$0xff]
    %v1537 = vld [vmem:[#allocation3 + $0x7a8] sm:$0xff]
    %v1538 = vld [vmem:[#allocation3 + $0x7b0] sm:$0xff]
    %v1539 = vld [vmem:[#allocation3 + $0x7b8] sm:$0xff]
    %v1540 = vld [vmem:[#allocation3 + $0x7c0] sm:$0xff]
    %v1541 = vld [vmem:[#allocation3 + $0x7c8] sm:$0xff]
    %v1542 = vld [vmem:[#allocation3 + $0x7d0] sm:$0xff]
    %v1543 = vld [vmem:[#allocation3 + $0x7d8] sm:$0xff]
    %v1544 = vld [vmem:[#allocation3 + $0x7e0] sm:$0xff]
    %v1545 = vld [vmem:[#allocation3 + $0x7e8] sm:$0xff]
    %v1546 = vld [vmem:[#allocation3 + $0x7f0] sm:$0xff]
    %v1547 = vld [vmem:[#allocation3 + $0x7f8] sm:$0xff]
    %v1548 = vld [vmem:[#allocation14 + $0x13] sm:$0xff]
    %v1550 = vlaneseq
    %v1551 = vshrl.u32 %v1550, 7
    %v1552 = vsub.s32 0, %v1551
    %v1553 = vrot.slane %v1548, %v1552
    %v1554 = vlaneseq
    %v1555 = vshrl.u32 %v1554, 7
    %v1556 = vsub.s32 1, %v1555
    %v1557 = vrot.slane %v1548, %v1556
    %v1558 = vlaneseq
    %v1559 = vshrl.u32 %v1558, 7
    %v1560 = vsub.s32 2, %v1559
    %v1561 = vrot.slane %v1548, %v1560
    %v1562 = vlaneseq
    %v1563 = vshrl.u32 %v1562, 7
    %v1564 = vsub.s32 3, %v1563
    %v1565 = vrot.slane %v1548, %v1564
    %v1566 = vlaneseq
    %v1567 = vshrl.u32 %v1566, 7
    %v1568 = vsub.s32 4, %v1567
    %v1569 = vrot.slane %v1548, %v1568
    %v1570 = vlaneseq
    %v1571 = vshrl.u32 %v1570, 7
    %v1572 = vsub.s32 5, %v1571
    %v1573 = vrot.slane %v1548, %v1572
    %v1574 = vlaneseq
    %v1575 = vshrl.u32 %v1574, 7
    %v1576 = vsub.s32 6, %v1575
    %v1577 = vrot.slane %v1548, %v1576
    %v1578 = vlaneseq
    %v1579 = vshrl.u32 %v1578, 7
    %v1580 = vsub.s32 7, %v1579
    %v1581 = vrot.slane %v1548, %v1580
    %1590 = vmatprep.subr.bf16.mxu0 %v1293
    %1591 = vmatpush1.bf16.msra.mxu0 %v1292
    %1592 = vmatprep.subr.bf16.mxu0 %v1301
    %1593 = vmatpush1.bf16.msra.mxu0 %v1300
    %1594 = vmatprep.subr.bf16.mxu0 %v1309
    %1595 = vmatpush1.bf16.msra.mxu0 %v1308
    %1596 = vmatprep.subr.bf16.mxu0 %v1317
    %1597 = vmatpush1.bf16.msra.mxu0 %v1316
    %1598 = vmatprep.subr.bf16.mxu0 %v1325
    %1599 = vmatpush1.bf16.msra.mxu0 %v1324
    %1600 = vmatprep.subr.bf16.mxu0 %v1333
    %1601 = vmatpush1.bf16.msra.mxu0 %v1332
    %1602 = vmatprep.subr.bf16.mxu0 %v1341
    %1603 = vmatpush1.bf16.msra.mxu0 %v1340
    %1604 = vmatprep.subr.bf16.mxu0 %v1349
    %1605 = vmatpush1.bf16.msra.mxu0 %v1348
    %1606 = vmatprep.subr.bf16.mxu0 %v1357
    %1607 = vmatpush1.bf16.msra.mxu0 %v1356
    %1608 = vmatprep.subr.bf16.mxu0 %v1365
    %1609 = vmatpush1.bf16.msra.mxu0 %v1364
    %1610 = vmatprep.subr.bf16.mxu0 %v1373
    %1611 = vmatpush1.bf16.msra.mxu0 %v1372
    %1612 = vmatprep.subr.bf16.mxu0 %v1381
    %1613 = vmatpush1.bf16.msra.mxu0 %v1380
    %1614 = vmatprep.subr.bf16.mxu0 %v1389
    %1615 = vmatpush1.bf16.msra.mxu0 %v1388
    %1616 = vmatprep.subr.bf16.mxu0 %v1397
    %1617 = vmatpush1.bf16.msra.mxu0 %v1396
    %1618 = vmatprep.subr.bf16.mxu0 %v1405
    %1619 = vmatpush1.bf16.msra.mxu0 %v1404
    %1620 = vmatprep.subr.bf16.mxu0 %v1413
    %1621 = vmatpush1.bf16.msra.mxu0 %v1412
    %1622 = vmatprep.mubr.bf16.mxu0 %v1285
    %1623 = vmatmul.mubr.bf16.gmra.mrb[0].mxu0 %v1284
    %v1624 = vpop.f32.mrb[0].mxu0
    %v1625 = vadd.f32 %v1553, %v1624
    %v1626 = vpop.f32.mrb[0].mxu0
    %v1627 = vadd.f32 %v1557, %v1626
    %v1628 = vpop.f32.mrb[0].mxu0
    %v1629 = vadd.f32 %v1553, %v1628
    %v1630 = vpop.f32.mrb[0].mxu0
    %v1631 = vadd.f32 %v1557, %v1630
    %1632 = vdwg.mxu0
    %1633 = vmatprep.subr.bf16.mxu0 %v1421
    %1634 = vmatpush1.bf16.msra.mxu0 %v1420
    %1635 = vmatprep.subr.bf16.mxu0 %v1429
    %1636 = vmatpush1.bf16.msra.mxu0 %v1428
    %1637 = vmatprep.subr.bf16.mxu0 %v1437
    %1638 = vmatpush1.bf16.msra.mxu0 %v1436
    %1639 = vmatprep.subr.bf16.mxu0 %v1445
    %1640 = vmatpush1.bf16.msra.mxu0 %v1444
    %1641 = vmatprep.subr.bf16.mxu0 %v1453
    %1642 = vmatpush1.bf16.msra.mxu0 %v1452
    %1643 = vmatprep.subr.bf16.mxu0 %v1461
    %1644 = vmatpush1.bf16.msra.mxu0 %v1460
    %1645 = vmatprep.subr.bf16.mxu0 %v1469
    %1646 = vmatpush1.bf16.msra.mxu0 %v1468
    %1647 = vmatprep.subr.bf16.mxu0 %v1477
    %1648 = vmatpush1.bf16.msra.mxu0 %v1476
    %1649 = vmatprep.subr.bf16.mxu0 %v1485
    %1650 = vmatpush1.bf16.msra.mxu0 %v1484
    %1651 = vmatprep.subr.bf16.mxu0 %v1493
    %1652 = vmatpush1.bf16.msra.mxu0 %v1492
    %1653 = vmatprep.subr.bf16.mxu0 %v1501
    %1654 = vmatpush1.bf16.msra.mxu0 %v1500
    %1655 = vmatprep.subr.bf16.mxu0 %v1509
    %1656 = vmatpush1.bf16.msra.mxu0 %v1508
    %1657 = vmatprep.subr.bf16.mxu0 %v1517
    %1658 = vmatpush1.bf16.msra.mxu0 %v1516
    %1659 = vmatprep.subr.bf16.mxu0 %v1525
    %1660 = vmatpush1.bf16.msra.mxu0 %v1524
    %1661 = vmatprep.subr.bf16.mxu0 %v1533
    %1662 = vmatpush1.bf16.msra.mxu0 %v1532
    %1663 = vmatprep.subr.bf16.mxu0 %v1541
    %1664 = vmatpush1.bf16.msra.mxu0 %v1540
    %1665 = vmatprep.mubr.bf16.mxu0 %v1287
    %1666 = vmatmul.mubr.bf16.gmra.mrb[0].mxu0 %v1286
    %v1667 = vpop.f32.mrb[0].mxu0
    %v1668 = vadd.f32 %v1625, %v1667
    %v1669 = vpop.f32.mrb[0].mxu0
    %v1670 = vadd.f32 %v1627, %v1669
    %v1671 = vpop.f32.mrb[0].mxu0
    %v1672 = vadd.f32 %v1629, %v1671
    %v1673 = vpop.f32.mrb[0].mxu0
    %v1674 = vadd.f32 %v1631, %v1673
    %1675 = vdwg.mxu0
    %1676 = vmatprep.subr.bf16.mxu0 %v1295
    %1677 = vmatpush1.bf16.msra.mxu0 %v1294
    %1678 = vmatprep.subr.bf16.mxu0 %v1303
    %1679 = vmatpush1.bf16.msra.mxu0 %v1302
    %1680 = vmatprep.subr.bf16.mxu0 %v1311
    %1681 = vmatpush1.bf16.msra.mxu0 %v1310
    %1682 = vmatprep.subr.bf16.mxu0 %v1319
    %1683 = vmatpush1.bf16.msra.mxu0 %v1318
    %1684 = vmatprep.subr.bf16.mxu0 %v1327
    %1685 = vmatpush1.bf16.msra.mxu0 %v1326
    %1686 = vmatprep.subr.bf16.mxu0 %v1335
    %1687 = vmatpush1.bf16.msra.mxu0 %v1334
    %1688 = vmatprep.subr.bf16.mxu0 %v1343
    %1689 = vmatpush1.bf16.msra.mxu0 %v1342
    %1690 = vmatprep.subr.bf16.mxu0 %v1351
    %1691 = vmatpush1.bf16.msra.mxu0 %v1350
    %1692 = vmatprep.subr.bf16.mxu0 %v1359
    %1693 = vmatpush1.bf16.msra.mxu0 %v1358
    %1694 = vmatprep.subr.bf16.mxu0 %v1367
    %1695 = vmatpush1.bf16.msra.mxu0 %v1366
    %1696 = vmatprep.subr.bf16.mxu0 %v1375
    %1697 = vmatpush1.bf16.msra.mxu0 %v1374
    %1698 = vmatprep.subr.bf16.mxu0 %v1383
    %1699 = vmatpush1.bf16.msra.mxu0 %v1382
    %1700 = vmatprep.subr.bf16.mxu0 %v1391
    %1701 = vmatpush1.bf16.msra.mxu0 %v1390
    %1702 = vmatprep.subr.bf16.mxu0 %v1399
    %1703 = vmatpush1.bf16.msra.mxu0 %v1398
    %1704 = vmatprep.subr.bf16.mxu0 %v1407
    %1705 = vmatpush1.bf16.msra.mxu0 %v1406
    %1706 = vmatprep.subr.bf16.mxu0 %v1415
    %1707 = vmatpush1.bf16.msra.mxu0 %v1414
    %1708 = vmatprep.mubr.bf16.mxu0 %v1285
    %1709 = vmatmul.mubr.bf16.gmra.mrb[0].mxu0 %v1284
    %v1710 = vpop.f32.mrb[0].mxu0
    %v1711 = vadd.f32 %v1561, %v1710
    %v1712 = vpop.f32.mrb[0].mxu0
    %v1713 = vadd.f32 %v1565, %v1712
    %v1714 = vpop.f32.mrb[0].mxu0
    %v1715 = vadd.f32 %v1561, %v1714
    %v1716 = vpop.f32.mrb[0].mxu0
    %v1717 = vadd.f32 %v1565, %v1716
    %1718 = vdwg.mxu0
    %1719 = vmatprep.subr.bf16.mxu0 %v1423
    %1720 = vmatpush1.bf16.msra.mxu0 %v1422
    %1721 = vmatprep.subr.bf16.mxu0 %v1431
    %1722 = vmatpush1.bf16.msra.mxu0 %v1430
    %1723 = vmatprep.subr.bf16.mxu0 %v1439
    %1724 = vmatpush1.bf16.msra.mxu0 %v1438
    %1725 = vmatprep.subr.bf16.mxu0 %v1447
    %1726 = vmatpush1.bf16.msra.mxu0 %v1446
    %1727 = vmatprep.subr.bf16.mxu0 %v1455
    %1728 = vmatpush1.bf16.msra.mxu0 %v1454
    %1729 = vmatprep.subr.bf16.mxu0 %v1463
    %1730 = vmatpush1.bf16.msra.mxu0 %v1462
    %1731 = vmatprep.subr.bf16.mxu0 %v1471
    %1732 = vmatpush1.bf16.msra.mxu0 %v1470
    %1733 = vmatprep.subr.bf16.mxu0 %v1479
    %1734 = vmatpush1.bf16.msra.mxu0 %v1478
    %1735 = vmatprep.subr.bf16.mxu0 %v1487
    %1736 = vmatpush1.bf16.msra.mxu0 %v1486
    %1737 = vmatprep.subr.bf16.mxu0 %v1495
    %1738 = vmatpush1.bf16.msra.mxu0 %v1494
    %1739 = vmatprep.subr.bf16.mxu0 %v1503
    %1740 = vmatpush1.bf16.msra.mxu0 %v1502
    %1741 = vmatprep.subr.bf16.mxu0 %v1511
    %1742 = vmatpush1.bf16.msra.mxu0 %v1510
    %1743 = vmatprep.subr.bf16.mxu0 %v1519
    %1744 = vmatpush1.bf16.msra.mxu0 %v1518
    %1745 = vmatprep.subr.bf16.mxu0 %v1527
    %1746 = vmatpush1.bf16.msra.mxu0 %v1526
    %1747 = vmatprep.subr.bf16.mxu0 %v1535
    %1748 = vmatpush1.bf16.msra.mxu0 %v1534
    %1749 = vmatprep.subr.bf16.mxu0 %v1543
    %1750 = vmatpush1.bf16.msra.mxu0 %v1542
    %1751 = vmatprep.mubr.bf16.mxu0 %v1287
    %1752 = vmatmul.mubr.bf16.gmra.mrb[0].mxu0 %v1286
    %v1753 = vpop.f32.mrb[0].mxu0
    %v1754 = vadd.f32 %v1711, %v1753
    %v1755 = vpop.f32.mrb[0].mxu0
    %v1756 = vadd.f32 %v1713, %v1755
    %v1757 = vpop.f32.mrb[0].mxu0
    %v1758 = vadd.f32 %v1715, %v1757
    %v1759 = vpop.f32.mrb[0].mxu0
    %v1760 = vadd.f32 %v1717, %v1759
    %1761 = vdwg.mxu0
    %1762 = vmatprep.subr.bf16.mxu0 %v1297
    %1763 = vmatpush1.bf16.msra.mxu0 %v1296
    %1764 = vmatprep.subr.bf16.mxu0 %v1305
    %1765 = vmatpush1.bf16.msra.mxu0 %v1304
    %1766 = vmatprep.subr.bf16.mxu0 %v1313
    %1767 = vmatpush1.bf16.msra.mxu0 %v1312
    %1768 = vmatprep.subr.bf16.mxu0 %v1321
    %1769 = vmatpush1.bf16.msra.mxu0 %v1320
    %1770 = vmatprep.subr.bf16.mxu0 %v1329
    %1771 = vmatpush1.bf16.msra.mxu0 %v1328
    %1772 = vmatprep.subr.bf16.mxu0 %v1337
    %1773 = vmatpush1.bf16.msra.mxu0 %v1336
    %1774 = vmatprep.subr.bf16.mxu0 %v1345
    %1775 = vmatpush1.bf16.msra.mxu0 %v1344
    %1776 = vmatprep.subr.bf16.mxu0 %v1353
    %1777 = vmatpush1.bf16.msra.mxu0 %v1352
    %1778 = vmatprep.subr.bf16.mxu0 %v1361
    %1779 = vmatpush1.bf16.msra.mxu0 %v1360
    %1780 = vmatprep.subr.bf16.mxu0 %v1369
    %1781 = vmatpush1.bf16.msra.mxu0 %v1368
    %1782 = vmatprep.subr.bf16.mxu0 %v1377
    %1783 = vmatpush1.bf16.msra.mxu0 %v1376
    %1784 = vmatprep.subr.bf16.mxu0 %v1385
    %1785 = vmatpush1.bf16.msra.mxu0 %v1384
    %1786 = vmatprep.subr.bf16.mxu0 %v1393
    %1787 = vmatpush1.bf16.msra.mxu0 %v1392
    %1788 = vmatprep.subr.bf16.mxu0 %v1401
    %1789 = vmatpush1.bf16.msra.mxu0 %v1400
    %1790 = vmatprep.subr.bf16.mxu0 %v1409
    %1791 = vmatpush1.bf16.msra.mxu0 %v1408
    %1792 = vmatprep.subr.bf16.mxu0 %v1417
    %1793 = vmatpush1.bf16.msra.mxu0 %v1416
    %1794 = vmatprep.mubr.bf16.mxu0 %v1285
    %1795 = vmatmul.mubr.bf16.gmra.mrb[0].mxu0 %v1284
    %v1796 = vpop.f32.mrb[0].mxu0
    %v1797 = vadd.f32 %v1569, %v1796
    %v1798 = vpop.f32.mrb[0].mxu0
    %v1799 = vadd.f32 %v1573, %v1798
    %v1800 = vpop.f32.mrb[0].mxu0
    %v1801 = vadd.f32 %v1569, %v1800
    %v1802 = vpop.f32.mrb[0].mxu0
    %v1803 = vadd.f32 %v1573, %v1802
    %1804 = vdwg.mxu0
    %1805 = vmatprep.subr.bf16.mxu0 %v1425
    %1806 = vmatpush1.bf16.msra.mxu0 %v1424
    %1807 = vmatprep.subr.bf16.mxu0 %v1433
    %1808 = vmatpush1.bf16.msra.mxu0 %v1432
    %1809 = vmatprep.subr.bf16.mxu0 %v1441
    %1810 = vmatpush1.bf16.msra.mxu0 %v1440
    %1811 = vmatprep.subr.bf16.mxu0 %v1449
    %1812 = vmatpush1.bf16.msra.mxu0 %v1448
    %1813 = vmatprep.subr.bf16.mxu0 %v1457
    %1814 = vmatpush1.bf16.msra.mxu0 %v1456
    %1815 = vmatprep.subr.bf16.mxu0 %v1465
    %1816 = vmatpush1.bf16.msra.mxu0 %v1464
    %1817 = vmatprep.subr.bf16.mxu0 %v1473
    %1818 = vmatpush1.bf16.msra.mxu0 %v1472
    %1819 = vmatprep.subr.bf16.mxu0 %v1481
    %1820 = vmatpush1.bf16.msra.mxu0 %v1480
    %1821 = vmatprep.subr.bf16.mxu0 %v1489
    %1822 = vmatpush1.bf16.msra.mxu0 %v1488
    %1823 = vmatprep.subr.bf16.mxu0 %v1497
    %1824 = vmatpush1.bf16.msra.mxu0 %v1496
    %1825 = vmatprep.subr.bf16.mxu0 %v1505
    %1826 = vmatpush1.bf16.msra.mxu0 %v1504
    %1827 = vmatprep.subr.bf16.mxu0 %v1513
    %1828 = vmatpush1.bf16.msra.mxu0 %v1512
    %1829 = vmatprep.subr.bf16.mxu0 %v1521
    %1830 = vmatpush1.bf16.msra.mxu0 %v1520
    %1831 = vmatprep.subr.bf16.mxu0 %v1529
    %1832 = vmatpush1.bf16.msra.mxu0 %v1528
    %1833 = vmatprep.subr.bf16.mxu0 %v1537
    %1834 = vmatpush1.bf16.msra.mxu0 %v1536
    %1835 = vmatprep.subr.bf16.mxu0 %v1545
    %1836 = vmatpush1.bf16.msra.mxu0 %v1544
    %1837 = vmatprep.mubr.bf16.mxu0 %v1287
    %1838 = vmatmul.mubr.bf16.gmra.mrb[0].mxu0 %v1286
    %v1839 = vpop.f32.mrb[0].mxu0
    %v1840 = vadd.f32 %v1797, %v1839
    %v1841 = vpop.f32.mrb[0].mxu0
    %v1842 = vadd.f32 %v1799, %v1841
    %v1843 = vpop.f32.mrb[0].mxu0
    %v1844 = vadd.f32 %v1801, %v1843
    %v1845 = vpop.f32.mrb[0].mxu0
    %v1846 = vadd.f32 %v1803, %v1845
    %1847 = vdwg.mxu0
    %1848 = vmatprep.subr.bf16.mxu0 %v1299
    %1849 = vmatpush1.bf16.msra.mxu0 %v1298
    %1850 = vmatprep.subr.bf16.mxu0 %v1307
    %1851 = vmatpush1.bf16.msra.mxu0 %v1306
    %1852 = vmatprep.subr.bf16.mxu0 %v1315
    %1853 = vmatpush1.bf16.msra.mxu0 %v1314
    %1854 = vmatprep.subr.bf16.mxu0 %v1323
    %1855 = vmatpush1.bf16.msra.mxu0 %v1322
    %1856 = vmatprep.subr.bf16.mxu0 %v1331
    %1857 = vmatpush1.bf16.msra.mxu0 %v1330
    %1858 = vmatprep.subr.bf16.mxu0 %v1339
    %1859 = vmatpush1.bf16.msra.mxu0 %v1338
    %1860 = vmatprep.subr.bf16.mxu0 %v1347
    %1861 = vmatpush1.bf16.msra.mxu0 %v1346
    %1862 = vmatprep.subr.bf16.mxu0 %v1355
    %1863 = vmatpush1.bf16.msra.mxu0 %v1354
    %1864 = vmatprep.subr.bf16.mxu0 %v1363
    %1865 = vmatpush1.bf16.msra.mxu0 %v1362
    %1866 = vmatprep.subr.bf16.mxu0 %v1371
    %1867 = vmatpush1.bf16.msra.mxu0 %v1370
    %1868 = vmatprep.subr.bf16.mxu0 %v1379
    %1869 = vmatpush1.bf16.msra.mxu0 %v1378
    %1870 = vmatprep.subr.bf16.mxu0 %v1387
    %1871 = vmatpush1.bf16.msra.mxu0 %v1386
    %1872 = vmatprep.subr.bf16.mxu0 %v1395
    %1873 = vmatpush1.bf16.msra.mxu0 %v1394
    %1874 = vmatprep.subr.bf16.mxu0 %v1403
    %1875 = vmatpush1.bf16.msra.mxu0 %v1402
    %1876 = vmatprep.subr.bf16.mxu0 %v1411
    %1877 = vmatpush1.bf16.msra.mxu0 %v1410
    %1878 = vmatprep.subr.bf16.mxu0 %v1419
    %1879 = vmatpush1.bf16.msra.mxu0 %v1418
    %1880 = vmatprep.mubr.bf16.mxu0 %v1285
    %1881 = vmatmul.mubr.bf16.gmra.mrb[0].mxu0 %v1284
    %v1882 = vpop.f32.mrb[0].mxu0
    %v1883 = vadd.f32 %v1577, %v1882
    %v1884 = vpop.f32.mrb[0].mxu0
    %v1885 = vadd.f32 %v1581, %v1884
    %v1886 = vpop.f32.mrb[0].mxu0
    %v1887 = vadd.f32 %v1577, %v1886
    %v1888 = vpop.f32.mrb[0].mxu0
    %v1889 = vadd.f32 %v1581, %v1888
    %1890 = vdwg.mxu0
    %1891 = vmatprep.subr.bf16.mxu0 %v1427
    %1892 = vmatpush1.bf16.msra.mxu0 %v1426
    %1893 = vmatprep.subr.bf16.mxu0 %v1435
    %1894 = vmatpush1.bf16.msra.mxu0 %v1434
    %1895 = vmatprep.subr.bf16.mxu0 %v1443
    %1896 = vmatpush1.bf16.msra.mxu0 %v1442
    %1897 = vmatprep.subr.bf16.mxu0 %v1451
    %1898 = vmatpush1.bf16.msra.mxu0 %v1450
    %1899 = vmatprep.subr.bf16.mxu0 %v1459
    %1900 = vmatpush1.bf16.msra.mxu0 %v1458
    %1901 = vmatprep.subr.bf16.mxu0 %v1467
    %1902 = vmatpush1.bf16.msra.mxu0 %v1466
    %1903 = vmatprep.subr.bf16.mxu0 %v1475
    %1904 = vmatpush1.bf16.msra.mxu0 %v1474
    %1905 = vmatprep.subr.bf16.mxu0 %v1483
    %1906 = vmatpush1.bf16.msra.mxu0 %v1482
    %1907 = vmatprep.subr.bf16.mxu0 %v1491
    %1908 = vmatpush1.bf16.msra.mxu0 %v1490
    %1909 = vmatprep.subr.bf16.mxu0 %v1499
    %1910 = vmatpush1.bf16.msra.mxu0 %v1498
    %1911 = vmatprep.subr.bf16.mxu0 %v1507
    %1912 = vmatpush1.bf16.msra.mxu0 %v1506
    %1913 = vmatprep.subr.bf16.mxu0 %v1515
    %1914 = vmatpush1.bf16.msra.mxu0 %v1514
    %1915 = vmatprep.subr.bf16.mxu0 %v1523
    %1916 = vmatpush1.bf16.msra.mxu0 %v1522
    %1917 = vmatprep.subr.bf16.mxu0 %v1531
    %1918 = vmatpush1.bf16.msra.mxu0 %v1530
    %1919 = vmatprep.subr.bf16.mxu0 %v1539
    %1920 = vmatpush1.bf16.msra.mxu0 %v1538
    %1921 = vmatprep.subr.bf16.mxu0 %v1547
    %1922 = vmatpush1.bf16.msra.mxu0 %v1546
    %1923 = vmatprep.mubr.bf16.mxu0 %v1287
    %1924 = vmatmul.mubr.bf16.gmra.mrb[0].mxu0 %v1286
    %v1925 = vpop.f32.mrb[0].mxu0
    %v1926 = vadd.f32 %v1883, %v1925
    %v1927 = vpop.f32.mrb[0].mxu0
    %v1928 = vadd.f32 %v1885, %v1927
    %v1929 = vpop.f32.mrb[0].mxu0
    %v1930 = vadd.f32 %v1887, %v1929
    %v1931 = vpop.f32.mrb[0].mxu0
    %v1932 = vadd.f32 %v1889, %v1931
    %1933 = vdwg.mxu0
    %v1934 = vld [vmem:[#allocation14 + $0x1b] sm:$0xff]
    %v1935 = vld [vmem:[#allocation14 + $0x23] sm:$0xff]
    %v1936 = vmul.f32 %v1668, %v142
    %v1937 = vmul.f32 %v1670, %v142
    %v1938 = vmul.f32 %v1754, %v142
    %v1939 = vmul.f32 %v1756, %v142
    %v1940 = vmul.f32 %v1840, %v142
    %v1941 = vmul.f32 %v1842, %v142
    %v1942 = vmul.f32 %v1926, %v142
    %v1943 = vmul.f32 %v1928, %v142
    %v1944 = vmul.f32 %v1672, %v143
    %v1945 = vmul.f32 %v1674, %v143
    %v1946 = vmul.f32 %v1758, %v143
    %v1947 = vmul.f32 %v1760, %v143
    %v1948 = vmul.f32 %v1844, %v143
    %v1949 = vmul.f32 %v1846, %v143
    %v1950 = vmul.f32 %v1930, %v143
    %v1951 = vmul.f32 %v1932, %v143
    %v1952 = vadd.f32 %v1936, %v1944
    %v1953 = vrot.slane %v1952, 4
    %v1954 = vadd.f32 %v1952, %v1953
    %v1955 = vrot.slane %v1954, 2
    %v1956 = vadd.f32 %v1954, %v1955
    %v1957 = vrot.slane %v1956, 1
    %v1958 = vadd.f32 %v1956, %v1957
    %v1959 = vadd.f32 %v1937, %v1945
    %v1960 = vrot.slane %v1959, 4
    %v1961 = vadd.f32 %v1959, %v1960
    %v1962 = vrot.slane %v1961, 2
    %v1963 = vadd.f32 %v1961, %v1962
    %v1964 = vrot.slane %v1963, 1
    %v1965 = vadd.f32 %v1963, %v1964
    %v1966 = vadd.f32 %v1938, %v1946
    %v1967 = vrot.slane %v1966, 4
    %v1968 = vadd.f32 %v1966, %v1967
    %v1969 = vrot.slane %v1968, 2
    %v1970 = vadd.f32 %v1968, %v1969
    %v1971 = vrot.slane %v1970, 1
    %v1972 = vadd.f32 %v1970, %v1971
    %v1973 = vadd.f32 %v1939, %v1947
    %v1974 = vrot.slane %v1973, 4
    %v1975 = vadd.f32 %v1973, %v1974
    %v1976 = vrot.slane %v1975, 2
    %v1977 = vadd.f32 %v1975, %v1976
    %v1978 = vrot.slane %v1977, 1
    %v1979 = vadd.f32 %v1977, %v1978
    %v1980 = vadd.f32 %v1940, %v1948
    %v1981 = vrot.slane %v1980, 4
    %v1982 = vadd.f32 %v1980, %v1981
    %v1983 = vrot.slane %v1982, 2
    %v1984 = vadd.f32 %v1982, %v1983
    %v1985 = vrot.slane %v1984, 1
    %v1986 = vadd.f32 %v1984, %v1985
    %v1987 = vadd.f32 %v1941, %v1949
    %v1988 = vrot.slane %v1987, 4
    %v1989 = vadd.f32 %v1987, %v1988
    %v1990 = vrot.slane %v1989, 2
    %v1991 = vadd.f32 %v1989, %v1990
    %v1992 = vrot.slane %v1991, 1
    %v1993 = vadd.f32 %v1991, %v1992
    %v1994 = vadd.f32 %v1942, %v1950
    %v1995 = vrot.slane %v1994, 4
    %v1996 = vadd.f32 %v1994, %v1995
    %v1997 = vrot.slane %v1996, 2
    %v1998 = vadd.f32 %v1996, %v1997
    %v1999 = vrot.slane %v1998, 1
    %v2000 = vadd.f32 %v1998, %v1999
    %v2001 = vadd.f32 %v1943, %v1951
    %v2002 = vrot.slane %v2001, 4
    %v2003 = vadd.f32 %v2001, %v2002
    %v2004 = vrot.slane %v2003, 2
    %v2005 = vadd.f32 %v2003, %v2004
    %v2006 = vrot.slane %v2005, 1
    %v2007 = vadd.f32 %v2005, %v2006
    %v2008 = vmul.f32 %v1936, %v1936
    %v2009 = vmul.f32 %v1937, %v1937
    %v2010 = vmul.f32 %v1938, %v1938
    %v2011 = vmul.f32 %v1939, %v1939
    %v2012 = vmul.f32 %v1940, %v1940
    %v2013 = vmul.f32 %v1941, %v1941
    %v2014 = vmul.f32 %v1942, %v1942
    %v2015 = vmul.f32 %v1943, %v1943
    %v2016 = vmul.f32 %v1944, %v1944
    %v2017 = vmul.f32 %v1945, %v1945
    %v2018 = vmul.f32 %v1946, %v1946
    %v2019 = vmul.f32 %v1947, %v1947
    %v2020 = vmul.f32 %v1948, %v1948
    %v2021 = vmul.f32 %v1949, %v1949
    %v2022 = vmul.f32 %v1950, %v1950
    %v2023 = vmul.f32 %v1951, %v1951
    %v2024 = vadd.f32 %v2008, %v2016
    %v2025 = vrot.slane %v2024, 4
    %v2026 = vadd.f32 %v2024, %v2025
    %v2027 = vrot.slane %v2026, 2
    %v2028 = vadd.f32 %v2026, %v2027
    %v2029 = vrot.slane %v2028, 1
    %v2030 = vadd.f32 %v2028, %v2029
    %v2031 = vadd.f32 %v2009, %v2017
    %v2032 = vrot.slane %v2031, 4
    %v2033 = vadd.f32 %v2031, %v2032
    %v2034 = vrot.slane %v2033, 2
    %v2035 = vadd.f32 %v2033, %v2034
    %v2036 = vrot.slane %v2035, 1
    %v2037 = vadd.f32 %v2035, %v2036
    %v2038 = vadd.f32 %v2010, %v2018
    %v2039 = vrot.slane %v2038, 4
    %v2040 = vadd.f32 %v2038, %v2039
    %v2041 = vrot.slane %v2040, 2
    %v2042 = vadd.f32 %v2040, %v2041
    %v2043 = vrot.slane %v2042, 1
    %v2044 = vadd.f32 %v2042, %v2043
    %v2045 = vadd.f32 %v2011, %v2019
    %v2046 = vrot.slane %v2045, 4
    %v2047 = vadd.f32 %v2045, %v2046
    %v2048 = vrot.slane %v2047, 2
    %v2049 = vadd.f32 %v2047, %v2048
    %v2050 = vrot.slane %v2049, 1
    %v2051 = vadd.f32 %v2049, %v2050
    %v2052 = vadd.f32 %v2012, %v2020
    %v2053 = vrot.slane %v2052, 4
    %v2054 = vadd.f32 %v2052, %v2053
    %v2055 = vrot.slane %v2054, 2
    %v2056 = vadd.f32 %v2054, %v2055
    %v2057 = vrot.slane %v2056, 1
    %v2058 = vadd.f32 %v2056, %v2057
    %v2059 = vadd.f32 %v2013, %v2021
    %v2060 = vrot.slane %v2059, 4
    %v2061 = vadd.f32 %v2059, %v2060
    %v2062 = vrot.slane %v2061, 2
    %v2063 = vadd.f32 %v2061, %v2062
    %v2064 = vrot.slane %v2063, 1
    %v2065 = vadd.f32 %v2063, %v2064
    %v2066 = vadd.f32 %v2014, %v2022
    %v2067 = vrot.slane %v2066, 4
    %v2068 = vadd.f32 %v2066, %v2067
    %v2069 = vrot.slane %v2068, 2
    %v2070 = vadd.f32 %v2068, %v2069
    %v2071 = vrot.slane %v2070, 1
    %v2072 = vadd.f32 %v2070, %v2071
    %v2073 = vadd.f32 %v2015, %v2023
    %v2074 = vrot.slane %v2073, 4
    %v2075 = vadd.f32 %v2073, %v2074
    %v2076 = vrot.slane %v2075, 2
    %v2077 = vadd.f32 %v2075, %v2076
    %v2078 = vrot.slane %v2077, 1
    %v2079 = vadd.f32 %v2077, %v2078
    %v2080 = vmul.f32 %v1958, 0.125
    %v2081 = vmul.f32 %v1965, 0.125
    %v2082 = vmul.f32 %v1972, 0.125
    %v2083 = vmul.f32 %v1979, 0.125
    %v2084 = vmul.f32 %v1986, 0.125
    %v2085 = vmul.f32 %v1993, 0.125
    %v2086 = vmul.f32 %v2000, 0.125
    %v2087 = vmul.f32 %v2007, 0.125
    %v2088 = vmul.f32 %v2030, 0.125
    %v2089 = vmul.f32 %v2037, 0.125
    %v2090 = vmul.f32 %v2044, 0.125
    %v2091 = vmul.f32 %v2051, 0.125
    %v2092 = vmul.f32 %v2058, 0.125
    %v2093 = vmul.f32 %v2065, 0.125
    %v2094 = vmul.f32 %v2072, 0.125
    %v2095 = vmul.f32 %v2079, 0.125
    %v2096 = vmul.f32 %v2080, %v2080
    %v2097 = vmul.f32 %v2081, %v2081
    %v2098 = vmul.f32 %v2082, %v2082
    %v2099 = vmul.f32 %v2083, %v2083
    %v2100 = vmul.f32 %v2084, %v2084
    %v2101 = vmul.f32 %v2085, %v2085
    %v2102 = vmul.f32 %v2086, %v2086
    %v2103 = vmul.f32 %v2087, %v2087
    %v2104 = vsub.f32 %v2088, %v2096
    %v2105 = vsub.f32 %v2089, %v2097
    %v2106 = vsub.f32 %v2090, %v2098
    %v2107 = vsub.f32 %v2091, %v2099
    %v2108 = vsub.f32 %v2092, %v2100
    %v2109 = vsub.f32 %v2093, %v2101
    %v2110 = vsub.f32 %v2094, %v2102
    %v2111 = vsub.f32 %v2095, %v2103
    %v2112 = vmax.f32 %v2104, 0.0
    %v2113 = vmax.f32 %v2105, 0.0
    %v2114 = vmax.f32 %v2106, 0.0
    %v2115 = vmax.f32 %v2107, 0.0
    %v2116 = vmax.f32 %v2108, 0.0
    %v2117 = vmax.f32 %v2109, 0.0
    %v2118 = vmax.f32 %v2110, 0.0
    %v2119 = vmax.f32 %v2111, 0.0
    %v2120 = vadd.f32 %v2112, 0.8
    %v2121 = vadd.f32 %v2113, 0.8
    %v2122 = vadd.f32 %v2114, 0.8
    %v2123 = vadd.f32 %v2115, 0.8
    %v2124 = vadd.f32 %v2116, 0.8
    %v2125 = vadd.f32 %v2117, 0.8
    %v2126 = vadd.f32 %v2118, 0.8
    %v2127 = vadd.f32 %v2119, 0.8
    %v2128 = vrsqrt.pop %v2120
    %v2129 = vrsqrt.pop %v2121
    %v2130 = vrsqrt.pop %v2122
    %v2131 = vrsqrt.pop %v2123
    %v2132 = vrsqrt.pop %v2124
    %v2133 = vrsqrt.pop %v2125
    %v2134 = vrsqrt.pop %v2126
    %v2135 = vrsqrt.pop %v2127
    %v2144 = vcombine.low %v2128, %v2129
    %v2145 = vcombine.low %v2130, %v2131
    %v2146 = vcombine.low %v2132, %v2133
    %v2147 = vcombine.low %v2134, %v2135
    %v2149 = vunpack.c.l.s4 1966171168
    %v2150 = vunpack.c.0.s8 %v2149
    %v2151 = vlaneseq
    %v2152 = vshrl.u32 %v2151, 7
    %v2153 = vsub.s32 %v2150, %v2152
    %v2154 = vrot.slane %v2144, %v2153
    %v2156 = vunpack.c.l.s4 1966171168
    %v2157 = vunpack.c.0.s8 %v2156
    %v2158 = vlaneseq
    %v2159 = vshrl.u32 %v2158, 7
    %v2160 = vsub.s32 %v2157, %v2159
    %v2161 = vrot.slane %v2145, %v2160
    %v2163 = vunpack.c.l.s4 1966171168
    %v2164 = vunpack.c.0.s8 %v2163
    %v2165 = vlaneseq
    %v2166 = vshrl.u32 %v2165, 7
    %v2167 = vsub.s32 %v2164, %v2166
    %v2168 = vrot.slane %v2146, %v2167
    %v2170 = vunpack.c.l.s4 1966171168
    %v2171 = vunpack.c.0.s8 %v2170
    %v2172 = vlaneseq
    %v2173 = vshrl.u32 %v2172, 7
    %v2174 = vsub.s32 %v2171, %v2173
    %v2175 = vrot.slane %v2147, %v2174
    %v2176 = vcombine.low %v2154, %v2161
    %v2177 = vcombine.low %v2168, %v2175
    %v2179 = vunpack.c.l.s4 1966171168
    %v2180 = vunpack.c.0.s8 %v2179
    %v2181 = vlaneseq
    %v2182 = vshrl.u32 %v2181, 7
    %v2183 = vsub.s32 %v2180, %v2182
    %v2184 = vrot.slane %v2176, %v2183
    %v2186 = vunpack.c.l.s4 1966171168
    %v2187 = vunpack.c.0.s8 %v2186
    %v2188 = vlaneseq
    %v2189 = vshrl.u32 %v2188, 7
    %v2190 = vsub.s32 %v2187, %v2189
    %v2191 = vrot.slane %v2177, %v2190
    %v2192 = vcombine.low %v2184, %v2191
    %v2194 = vmul.f32 %v1934, %v2192
    %v2196 = vlaneseq
    %v2197 = vshrl.u32 %v2196, 7
    %v2198 = vsub.s32 0, %v2197
    %v2199 = vrot.slane %v2194, %v2198
    %v2200 = vlaneseq
    %v2201 = vshrl.u32 %v2200, 7
    %v2202 = vsub.s32 1, %v2201
    %v2203 = vrot.slane %v2194, %v2202
    %v2204 = vlaneseq
    %v2205 = vshrl.u32 %v2204, 7
    %v2206 = vsub.s32 2, %v2205
    %v2207 = vrot.slane %v2194, %v2206
    %v2208 = vlaneseq
    %v2209 = vshrl.u32 %v2208, 7
    %v2210 = vsub.s32 3, %v2209
    %v2211 = vrot.slane %v2194, %v2210
    %v2212 = vlaneseq
    %v2213 = vshrl.u32 %v2212, 7
    %v2214 = vsub.s32 4, %v2213
    %v2215 = vrot.slane %v2194, %v2214
    %v2216 = vlaneseq
    %v2217 = vshrl.u32 %v2216, 7
    %v2218 = vsub.s32 5, %v2217
    %v2219 = vrot.slane %v2194, %v2218
    %v2220 = vlaneseq
    %v2221 = vshrl.u32 %v2220, 7
    %v2222 = vsub.s32 6, %v2221
    %v2223 = vrot.slane %v2194, %v2222
    %v2224 = vlaneseq
    %v2225 = vshrl.u32 %v2224, 7
    %v2226 = vsub.s32 7, %v2225
    %v2227 = vrot.slane %v2194, %v2226
    %v2236 = vmul.f32 %v2080, %v2199
    %v2237 = vmul.f32 %v2081, %v2203
    %v2238 = vmul.f32 %v2082, %v2207
    %v2239 = vmul.f32 %v2083, %v2211
    %v2240 = vmul.f32 %v2084, %v2215
    %v2241 = vmul.f32 %v2085, %v2219
    %v2242 = vmul.f32 %v2086, %v2223
    %v2243 = vmul.f32 %v2087, %v2227
    %v2252 = vcombine.low %v2236, %v2237
    %v2253 = vcombine.low %v2238, %v2239
    %v2254 = vcombine.low %v2240, %v2241
    %v2255 = vcombine.low %v2242, %v2243
    %v2257 = vunpack.c.l.s4 1966171168
    %v2258 = vunpack.c.0.s8 %v2257
    %v2259 = vlaneseq
    %v2260 = vshrl.u32 %v2259, 7
    %v2261 = vsub.s32 %v2258, %v2260
    %v2262 = vrot.slane %v2252, %v2261
    %v2264 = vunpack.c.l.s4 1966171168
    %v2265 = vunpack.c.0.s8 %v2264
    %v2266 = vlaneseq
    %v2267 = vshrl.u32 %v2266, 7
    %v2268 = vsub.s32 %v2265, %v2267
    %v2269 = vrot.slane %v2253, %v2268
    %v2271 = vunpack.c.l.s4 1966171168
    %v2272 = vunpack.c.0.s8 %v2271
    %v2273 = vlaneseq
    %v2274 = vshrl.u32 %v2273, 7
    %v2275 = vsub.s32 %v2272, %v2274
    %v2276 = vrot.slane %v2254, %v2275
    %v2278 = vunpack.c.l.s4 1966171168
    %v2279 = vunpack.c.0.s8 %v2278
    %v2280 = vlaneseq
    %v2281 = vshrl.u32 %v2280, 7
    %v2282 = vsub.s32 %v2279, %v2281
    %v2283 = vrot.slane %v2255, %v2282
    %v2284 = vcombine.low %v2262, %v2269
    %v2285 = vcombine.low %v2276, %v2283
    %v2287 = vunpack.c.l.s4 1966171168
    %v2288 = vunpack.c.0.s8 %v2287
    %v2289 = vlaneseq
    %v2290 = vshrl.u32 %v2289, 7
    %v2291 = vsub.s32 %v2288, %v2290
    %v2292 = vrot.slane %v2284, %v2291
    %v2294 = vunpack.c.l.s4 1966171168
    %v2295 = vunpack.c.0.s8 %v2294
    %v2296 = vlaneseq
    %v2297 = vshrl.u32 %v2296, 7
    %v2298 = vsub.s32 %v2295, %v2297
    %v2299 = vrot.slane %v2285, %v2298
    %v2300 = vcombine.low %v2292, %v2299
    %v2302 = vsub.f32 %v1935, %v2300
    %v2303 = vmul.f32 %v1668, %v2199
    %v2304 = vmul.f32 %v1670, %v2203
    %v2305 = vmul.f32 %v1754, %v2207
    %v2306 = vmul.f32 %v1756, %v2211
    %v2307 = vmul.f32 %v1840, %v2215
    %v2308 = vmul.f32 %v1842, %v2219
    %v2309 = vmul.f32 %v1926, %v2223
    %v2310 = vmul.f32 %v1928, %v2227
    %v2311 = vmul.f32 %v1672, %v2199
    %v2312 = vmul.f32 %v1674, %v2203
    %v2313 = vmul.f32 %v1758, %v2207
    %v2314 = vmul.f32 %v1760, %v2211
    %v2315 = vmul.f32 %v1844, %v2215
    %v2316 = vmul.f32 %v1846, %v2219
    %v2317 = vmul.f32 %v1930, %v2223
    %v2318 = vmul.f32 %v1932, %v2227
    %v2320 = vlaneseq
    %v2321 = vshrl.u32 %v2320, 7
    %v2322 = vsub.s32 0, %v2321
    %v2323 = vrot.slane %v2302, %v2322
    %v2324 = vlaneseq
    %v2325 = vshrl.u32 %v2324, 7
    %v2326 = vsub.s32 1, %v2325
    %v2327 = vrot.slane %v2302, %v2326
    %v2328 = vlaneseq
    %v2329 = vshrl.u32 %v2328, 7
    %v2330 = vsub.s32 2, %v2329
    %v2331 = vrot.slane %v2302, %v2330
    %v2332 = vlaneseq
    %v2333 = vshrl.u32 %v2332, 7
    %v2334 = vsub.s32 3, %v2333
    %v2335 = vrot.slane %v2302, %v2334
    %v2336 = vlaneseq
    %v2337 = vshrl.u32 %v2336, 7
    %v2338 = vsub.s32 4, %v2337
    %v2339 = vrot.slane %v2302, %v2338
    %v2340 = vlaneseq
    %v2341 = vshrl.u32 %v2340, 7
    %v2342 = vsub.s32 5, %v2341
    %v2343 = vrot.slane %v2302, %v2342
    %v2344 = vlaneseq
    %v2345 = vshrl.u32 %v2344, 7
    %v2346 = vsub.s32 6, %v2345
    %v2347 = vrot.slane %v2302, %v2346
    %v2348 = vlaneseq
    %v2349 = vshrl.u32 %v2348, 7
    %v2350 = vsub.s32 7, %v2349
    %v2351 = vrot.slane %v2302, %v2350
    %v2360 = vadd.f32 %v2303, %v2323
    %v2361 = vadd.f32 %v2304, %v2327
    %v2362 = vadd.f32 %v2305, %v2331
    %v2363 = vadd.f32 %v2306, %v2335
    %v2364 = vadd.f32 %v2307, %v2339
    %v2365 = vadd.f32 %v2308, %v2343
    %v2366 = vadd.f32 %v2309, %v2347
    %v2367 = vadd.f32 %v2310, %v2351
    %v2368 = vadd.f32 %v2311, %v2323
    %v2369 = vadd.f32 %v2312, %v2327
    %v2370 = vadd.f32 %v2313, %v2331
    %v2371 = vadd.f32 %v2314, %v2335
    %v2372 = vadd.f32 %v2315, %v2339
    %v2373 = vadd.f32 %v2316, %v2343
    %v2374 = vadd.f32 %v2317, %v2347
    %v2375 = vadd.f32 %v2318, %v2351
    %v2376 = vmul.f32 %v2360, 0.2
    %v2377 = vmul.f32 %v2361, 0.2
    %v2378 = vmul.f32 %v2362, 0.2
    %v2379 = vmul.f32 %v2363, 0.2
    %v2380 = vmul.f32 %v2364, 0.2
    %v2381 = vmul.f32 %v2365, 0.2
    %v2382 = vmul.f32 %v2366, 0.2
    %v2383 = vmul.f32 %v2367, 0.2
    %v2384 = vmul.f32 %v2368, 0.2
    %v2385 = vmul.f32 %v2369, 0.2
    %v2386 = vmul.f32 %v2370, 0.2
    %v2387 = vmul.f32 %v2371, 0.2
    %v2388 = vmul.f32 %v2372, 0.2
    %v2389 = vmul.f32 %v2373, 0.2
    %v2390 = vmul.f32 %v2374, 0.2
    %v2391 = vmul.f32 %v2375, 0.2
    %v2392 = vmax.f32 %v2360, %v2376
    %v2393 = vmax.f32 %v2361, %v2377
    %v2394 = vmax.f32 %v2362, %v2378
    %v2395 = vmax.f32 %v2363, %v2379
    %v2396 = vmax.f32 %v2364, %v2380
    %v2397 = vmax.f32 %v2365, %v2381
    %v2398 = vmax.f32 %v2366, %v2382
    %v2399 = vmax.f32 %v2367, %v2383
    %v2400 = vmax.f32 %v2368, %v2384
    %v2401 = vmax.f32 %v2369, %v2385
    %v2402 = vmax.f32 %v2370, %v2386
    %v2403 = vmax.f32 %v2371, %v2387
    %v2404 = vmax.f32 %v2372, %v2388
    %v2405 = vmax.f32 %v2373, %v2389
    %v2406 = vmax.f32 %v2374, %v2390
    %v2407 = vmax.f32 %v2375, %v2391
    %v2408 = vpack.c.bf16 %v2400, %v2392
    %v2409 = vpack.c.bf16 %v2401, %v2393
    %v2410 = vpack.c.bf16 %v2402, %v2394
    %v2411 = vpack.c.bf16 %v2403, %v2395
    %v2412 = vpack.c.bf16 %v2404, %v2396
    %v2413 = vpack.c.bf16 %v2405, %v2397
    %v2414 = vpack.c.bf16 %v2406, %v2398
    %v2415 = vpack.c.bf16 %v2407, %v2399
    %s2416 = smul.u32 4, 128
    %s2417 = smul.u32 %s2416, 1
    %s2418 = sshll.u32 %s2417, 4
    %2419 = dma.done %s123, %s2418
    %v2420 = vld [vmem:[#allocation4] sm:$0xff]
    %v2421 = vld [vmem:[#allocation4 + $0x8] sm:$0xff]
    %v2422 = vld [vmem:[#allocation4 + $0x10] sm:$0xff]
    %v2423 = vld [vmem:[#allocation4 + $0x18] sm:$0xff]
    %v2424 = vld [vmem:[#allocation4 + $0x20] sm:$0xff]
    %v2425 = vld [vmem:[#allocation4 + $0x28] sm:$0xff]
    %v2426 = vld [vmem:[#allocation4 + $0x30] sm:$0xff]
    %v2427 = vld [vmem:[#allocation4 + $0x38] sm:$0xff]
    %v2428 = vld [vmem:[#allocation4 + $0x40] sm:$0xff]
    %v2429 = vld [vmem:[#allocation4 + $0x48] sm:$0xff]
    %v2430 = vld [vmem:[#allocation4 + $0x50] sm:$0xff]
    %v2431 = vld [vmem:[#allocation4 + $0x58] sm:$0xff]
    %v2432 = vld [vmem:[#allocation4 + $0x60] sm:$0xff]
    %v2433 = vld [vmem:[#allocation4 + $0x68] sm:$0xff]
    %v2434 = vld [vmem:[#allocation4 + $0x70] sm:$0xff]
    %v2435 = vld [vmem:[#allocation4 + $0x78] sm:$0xff]
    %v2436 = vld [vmem:[#allocation4 + $0x80] sm:$0xff]
    %v2437 = vld [vmem:[#allocation4 + $0x88] sm:$0xff]
    %v2438 = vld [vmem:[#allocation4 + $0x90] sm:$0xff]
    %v2439 = vld [vmem:[#allocation4 + $0x98] sm:$0xff]
    %v2440 = vld [vmem:[#allocation4 + $0xa0] sm:$0xff]
    %v2441 = vld [vmem:[#allocation4 + $0xa8] sm:$0xff]
    %v2442 = vld [vmem:[#allocation4 + $0xb0] sm:$0xff]
    %v2443 = vld [vmem:[#allocation4 + $0xb8] sm:$0xff]
    %v2444 = vld [vmem:[#allocation4 + $0xc0] sm:$0xff]
    %v2445 = vld [vmem:[#allocation4 + $0xc8] sm:$0xff]
    %v2446 = vld [vmem:[#allocation4 + $0xd0] sm:$0xff]
    %v2447 = vld [vmem:[#allocation4 + $0xd8] sm:$0xff]
    %v2448 = vld [vmem:[#allocation4 + $0xe0] sm:$0xff]
    %v2449 = vld [vmem:[#allocation4 + $0xe8] sm:$0xff]
    %v2450 = vld [vmem:[#allocation4 + $0xf0] sm:$0xff]
    %v2451 = vld [vmem:[#allocation4 + $0xf8] sm:$0xff]
    %v2452 = vld [vmem:[#allocation4 + $0x100] sm:$0xff]
    %v2453 = vld [vmem:[#allocation4 + $0x108] sm:$0xff]
    %v2454 = vld [vmem:[#allocation4 + $0x110] sm:$0xff]
    %v2455 = vld [vmem:[#allocation4 + $0x118] sm:$0xff]
    %v2456 = vld [vmem:[#allocation4 + $0x120] sm:$0xff]
    %v2457 = vld [vmem:[#allocation4 + $0x128] sm:$0xff]
    %v2458 = vld [vmem:[#allocation4 + $0x130] sm:$0xff]
    %v2459 = vld [vmem:[#allocation4 + $0x138] sm:$0xff]
    %v2460 = vld [vmem:[#allocation4 + $0x140] sm:$0xff]
    %v2461 = vld [vmem:[#allocation4 + $0x148] sm:$0xff]
    %v2462 = vld [vmem:[#allocation4 + $0x150] sm:$0xff]
    %v2463 = vld [vmem:[#allocation4 + $0x158] sm:$0xff]
    %v2464 = vld [vmem:[#allocation4 + $0x160] sm:$0xff]
    %v2465 = vld [vmem:[#allocation4 + $0x168] sm:$0xff]
    %v2466 = vld [vmem:[#allocation4 + $0x170] sm:$0xff]
    %v2467 = vld [vmem:[#allocation4 + $0x178] sm:$0xff]
    %v2468 = vld [vmem:[#allocation4 + $0x180] sm:$0xff]
    %v2469 = vld [vmem:[#allocation4 + $0x188] sm:$0xff]
    %v2470 = vld [vmem:[#allocation4 + $0x190] sm:$0xff]
    %v2471 = vld [vmem:[#allocation4 + $0x198] sm:$0xff]
    %v2472 = vld [vmem:[#allocation4 + $0x1a0] sm:$0xff]
    %v2473 = vld [vmem:[#allocation4 + $0x1a8] sm:$0xff]
    %v2474 = vld [vmem:[#allocation4 + $0x1b0] sm:$0xff]
    %v2475 = vld [vmem:[#allocation4 + $0x1b8] sm:$0xff]
    %v2476 = vld [vmem:[#allocation4 + $0x1c0] sm:$0xff]
    %v2477 = vld [vmem:[#allocation4 + $0x1c8] sm:$0xff]
    %v2478 = vld [vmem:[#allocation4 + $0x1d0] sm:$0xff]
    %v2479 = vld [vmem:[#allocation4 + $0x1d8] sm:$0xff]
    %v2480 = vld [vmem:[#allocation4 + $0x1e0] sm:$0xff]
    %v2481 = vld [vmem:[#allocation4 + $0x1e8] sm:$0xff]
    %v2482 = vld [vmem:[#allocation4 + $0x1f0] sm:$0xff]
    %v2483 = vld [vmem:[#allocation4 + $0x1f8] sm:$0xff]
    %v2484 = vld [vmem:[#allocation14 + $0x2b] sm:$0x1]
    %v2486 = vlaneseq
    %v2487 = vshrl.u32 %v2486, 7
    %v2488 = vsub.s32 0, %v2487
    %v2489 = vrot.slane %v2484, %v2488
    %2491 = vmatprep.subr.bf16.mxu0 0
    %2492 = vmatpush1.bf16.msra.mxu0 %v2420
    %2493 = vmatprep.subr.bf16.mxu0 0
    %2494 = vmatpush1.bf16.msra.mxu0 %v2421
    %2495 = vmatprep.subr.bf16.mxu0 0
    %2496 = vmatpush1.bf16.msra.mxu0 %v2422
    %2497 = vmatprep.subr.bf16.mxu0 0
    %2498 = vmatpush1.bf16.msra.mxu0 %v2423
    %2499 = vmatprep.subr.bf16.mxu0 0
    %2500 = vmatpush1.bf16.msra.mxu0 %v2424
    %2501 = vmatprep.subr.bf16.mxu0 0
    %2502 = vmatpush1.bf16.msra.mxu0 %v2425
    %2503 = vmatprep.subr.bf16.mxu0 0
    %2504 = vmatpush1.bf16.msra.mxu0 %v2426
    %2505 = vmatprep.subr.bf16.mxu0 0
    %2506 = vmatpush1.bf16.msra.mxu0 %v2427
    %2507 = vmatprep.subr.bf16.mxu0 0
    %2508 = vmatpush1.bf16.msra.mxu0 %v2428
    %2509 = vmatprep.subr.bf16.mxu0 0
    %2510 = vmatpush1.bf16.msra.mxu0 %v2429
    %2511 = vmatprep.subr.bf16.mxu0 0
    %2512 = vmatpush1.bf16.msra.mxu0 %v2430
    %2513 = vmatprep.subr.bf16.mxu0 0
    %2514 = vmatpush1.bf16.msra.mxu0 %v2431
    %2515 = vmatprep.subr.bf16.mxu0 0
    %2516 = vmatpush1.bf16.msra.mxu0 %v2432
    %2517 = vmatprep.subr.bf16.mxu0 0
    %2518 = vmatpush1.bf16.msra.mxu0 %v2433
    %2519 = vmatprep.subr.bf16.mxu0 0
    %2520 = vmatpush1.bf16.msra.mxu0 %v2434
    %2521 = vmatprep.subr.bf16.mxu0 0
    %2522 = vmatpush1.bf16.msra.mxu0 %v2435
    %2523 = vmatprep.mubr.bf16.mxu0 %v2409
    %2524 = vmatmul.mubr.bf16.gmra.mrb[0].mxu0 %v2408
    %v2525 = vpop.f32.mrb[0].mxu0
    %v2526 = vadd.f32 %v2489, %v2525
    %v2527 = vpop.f32.mrb[0].mxu0
    %v2528 = vpop.f32.mrb[0].mxu0
    %v2529 = vadd.f32 %v2489, %v2528
    %v2530 = vpop.f32.mrb[0].mxu0
    %2531 = vdwg.mxu0
    %2532 = vmatprep.subr.bf16.mxu0 0
    %2533 = vmatpush1.bf16.msra.mxu0 %v2436
    %2534 = vmatprep.subr.bf16.mxu0 0
    %2535 = vmatpush1.bf16.msra.mxu0 %v2437
    %2536 = vmatprep.subr.bf16.mxu0 0
    %2537 = vmatpush1.bf16.msra.mxu0 %v2438
    %2538 = vmatprep.subr.bf16.mxu0 0
    %2539 = vmatpush1.bf16.msra.mxu0 %v2439
    %2540 = vmatprep.subr.bf16.mxu0 0
    %2541 = vmatpush1.bf16.msra.mxu0 %v2440
    %2542 = vmatprep.subr.bf16.mxu0 0
    %2543 = vmatpush1.bf16.msra.mxu0 %v2441
    %2544 = vmatprep.subr.bf16.mxu0 0
    %2545 = vmatpush1.bf16.msra.mxu0 %v2442
    %2546 = vmatprep.subr.bf16.mxu0 0
    %2547 = vmatpush1.bf16.msra.mxu0 %v2443
    %2548 = vmatprep.subr.bf16.mxu0 0
    %2549 = vmatpush1.bf16.msra.mxu0 %v2444
    %2550 = vmatprep.subr.bf16.mxu0 0
    %2551 = vmatpush1.bf16.msra.mxu0 %v2445
    %2552 = vmatprep.subr.bf16.mxu0 0
    %2553 = vmatpush1.bf16.msra.mxu0 %v2446
    %2554 = vmatprep.subr.bf16.mxu0 0
    %2555 = vmatpush1.bf16.msra.mxu0 %v2447
    %2556 = vmatprep.subr.bf16.mxu0 0
    %2557 = vmatpush1.bf16.msra.mxu0 %v2448
    %2558 = vmatprep.subr.bf16.mxu0 0
    %2559 = vmatpush1.bf16.msra.mxu0 %v2449
    %2560 = vmatprep.subr.bf16.mxu0 0
    %2561 = vmatpush1.bf16.msra.mxu0 %v2450
    %2562 = vmatprep.subr.bf16.mxu0 0
    %2563 = vmatpush1.bf16.msra.mxu0 %v2451
    %2564 = vmatprep.mubr.bf16.mxu0 %v2411
    %2565 = vmatmul.mubr.bf16.gmra.mrb[0].mxu0 %v2410
    %v2566 = vpop.f32.mrb[0].mxu0
    %v2567 = vadd.f32 %v2526, %v2566
    %v2568 = vpop.f32.mrb[0].mxu0
    %v2569 = vpop.f32.mrb[0].mxu0
    %v2570 = vadd.f32 %v2529, %v2569
    %v2571 = vpop.f32.mrb[0].mxu0
    %2572 = vdwg.mxu0
    %2573 = vmatprep.subr.bf16.mxu0 0
    %2574 = vmatpush1.bf16.msra.mxu0 %v2452
    %2575 = vmatprep.subr.bf16.mxu0 0
    %2576 = vmatpush1.bf16.msra.mxu0 %v2453
    %2577 = vmatprep.subr.bf16.mxu0 0
    %2578 = vmatpush1.bf16.msra.mxu0 %v2454
    %2579 = vmatprep.subr.bf16.mxu0 0
    %2580 = vmatpush1.bf16.msra.mxu0 %v2455
    %2581 = vmatprep.subr.bf16.mxu0 0
    %2582 = vmatpush1.bf16.msra.mxu0 %v2456
    %2583 = vmatprep.subr.bf16.mxu0 0
    %2584 = vmatpush1.bf16.msra.mxu0 %v2457
    %2585 = vmatprep.subr.bf16.mxu0 0
    %2586 = vmatpush1.bf16.msra.mxu0 %v2458
    %2587 = vmatprep.subr.bf16.mxu0 0
    %2588 = vmatpush1.bf16.msra.mxu0 %v2459
    %2589 = vmatprep.subr.bf16.mxu0 0
    %2590 = vmatpush1.bf16.msra.mxu0 %v2460
    %2591 = vmatprep.subr.bf16.mxu0 0
    %2592 = vmatpush1.bf16.msra.mxu0 %v2461
    %2593 = vmatprep.subr.bf16.mxu0 0
    %2594 = vmatpush1.bf16.msra.mxu0 %v2462
    %2595 = vmatprep.subr.bf16.mxu0 0
    %2596 = vmatpush1.bf16.msra.mxu0 %v2463
    %2597 = vmatprep.subr.bf16.mxu0 0
    %2598 = vmatpush1.bf16.msra.mxu0 %v2464
    %2599 = vmatprep.subr.bf16.mxu0 0
    %2600 = vmatpush1.bf16.msra.mxu0 %v2465
    %2601 = vmatprep.subr.bf16.mxu0 0
    %2602 = vmatpush1.bf16.msra.mxu0 %v2466
    %2603 = vmatprep.subr.bf16.mxu0 0
    %2604 = vmatpush1.bf16.msra.mxu0 %v2467
    %2605 = vmatprep.mubr.bf16.mxu0 %v2413
    %2606 = vmatmul.mubr.bf16.gmra.mrb[0].mxu0 %v2412
    %v2607 = vpop.f32.mrb[0].mxu0
    %v2608 = vadd.f32 %v2567, %v2607
    %v2609 = vpop.f32.mrb[0].mxu0
    %v2610 = vpop.f32.mrb[0].mxu0
    %v2611 = vadd.f32 %v2570, %v2610
    %v2612 = vpop.f32.mrb[0].mxu0
    %2613 = vdwg.mxu0
    %2614 = vmatprep.subr.bf16.mxu0 0
    %2615 = vmatpush1.bf16.msra.mxu0 %v2468
    %2616 = vmatprep.subr.bf16.mxu0 0
    %2617 = vmatpush1.bf16.msra.mxu0 %v2469
    %2618 = vmatprep.subr.bf16.mxu0 0
    %2619 = vmatpush1.bf16.msra.mxu0 %v2470
    %2620 = vmatprep.subr.bf16.mxu0 0
    %2621 = vmatpush1.bf16.msra.mxu0 %v2471
    %2622 = vmatprep.subr.bf16.mxu0 0
    %2623 = vmatpush1.bf16.msra.mxu0 %v2472
    %2624 = vmatprep.subr.bf16.mxu0 0
    %2625 = vmatpush1.bf16.msra.mxu0 %v2473
    %2626 = vmatprep.subr.bf16.mxu0 0
    %2627 = vmatpush1.bf16.msra.mxu0 %v2474
    %2628 = vmatprep.subr.bf16.mxu0 0
    %2629 = vmatpush1.bf16.msra.mxu0 %v2475
    %2630 = vmatprep.subr.bf16.mxu0 0
    %2631 = vmatpush1.bf16.msra.mxu0 %v2476
    %2632 = vmatprep.subr.bf16.mxu0 0
    %2633 = vmatpush1.bf16.msra.mxu0 %v2477
    %2634 = vmatprep.subr.bf16.mxu0 0
    %2635 = vmatpush1.bf16.msra.mxu0 %v2478
    %2636 = vmatprep.subr.bf16.mxu0 0
    %2637 = vmatpush1.bf16.msra.mxu0 %v2479
    %2638 = vmatprep.subr.bf16.mxu0 0
    %2639 = vmatpush1.bf16.msra.mxu0 %v2480
    %2640 = vmatprep.subr.bf16.mxu0 0
    %2641 = vmatpush1.bf16.msra.mxu0 %v2481
    %2642 = vmatprep.subr.bf16.mxu0 0
    %2643 = vmatpush1.bf16.msra.mxu0 %v2482
    %2644 = vmatprep.subr.bf16.mxu0 0
    %2645 = vmatpush1.bf16.msra.mxu0 %v2483
    %2646 = vmatprep.mubr.bf16.mxu0 %v2415
    %2647 = vmatmul.mubr.bf16.gmra.mrb[0].mxu0 %v2414
    %v2648 = vpop.f32.mrb[0].mxu0
    %v2649 = vadd.f32 %v2608, %v2648
    %v2650 = vpop.f32.mrb[0].mxu0
    %v2651 = vpop.f32.mrb[0].mxu0
    %v2652 = vadd.f32 %v2611, %v2651
    %v2653 = vpop.f32.mrb[0].mxu0
    %2654 = vdwg.mxu0
    %v2655 = vtanh.pop %v2649
    %v2656 = vtanh.pop %v2652
    %v2657 = vld [vmem:[#allocation14 + $0x2c] sm:$0x1]
    %v2659 = vlaneseq
    %v2660 = vshrl.u32 %v2659, 7
    %v2661 = vsub.s32 0, %v2660
    %v2662 = vrot.slane %v2657, %v2661
    %v2664 = vmul.f32 %v2662, %v2655
    %v2665 = vmul.f32 %v2662, %v2656
    %2666 = vst [vmem:[#allocation15] sm:$0xff] %v2664
    %2667 = vst [vmem:[#allocation15 + $0x8] sm:$0xff] %v2665
    // Predicated region
    $region46: #{tpu_custom_call.1} parent=1 // pred_check
      _
    $region47: #{tpu_custom_call.1} parent=1 // pred_check_branch
      %2669 = sbr.rel (0) target = $region49
    $region48: #{tpu_custom_call.1} parent=1 // pred_region
      %s2671 = ssub.s32 256, 256
      %2672 = vsyncadd [#allocation8], %s2671
      %s2673 = sshll.u32 [#allocation15], 4
      %s2674 = int_to_ptr.vmem [resolvable:$true] %s2673
      %2679 = dma.vmem_to_hbm [thread:$0]  %s2674, 256, %s7, [#allocation8], 128, 128, 8
    $region49: #{tpu_custom_call.1} parent=1 // pred_fallthru
      _
    // Predicated region
    $region50: #{tpu_custom_call.1} parent=1 // pred_check
      _
    $region51: #{tpu_custom_call.1} parent=1 // pred_check_branch
      %2681 = sbr.rel (0) target = $region53
    $region52: #{tpu_custom_call.1} parent=1 // pred_region
      %2682 = dma.done [#allocation8], 256
    $region53: #{tpu_custom_call.1} parent=1 // pred_fallthru
      _
    %2683 = vsyncpa [#allocation7], 1
    %2684 = vsyncpa [#allocation10], 1
    %2685 = vsyncpa [#allocation13], 1
    %2686 = vsyncpa [#allocation8], 1
  %2687 = vsyncmov [#allocation5]
  %s2688 = vpop.sfrf %2687
  %p2689 = scmp.eq.s32.totalorder %s2688, 0
  %p2690 = pneg %p2689
  %2692 = shalt.err (%p2690)
  %s2693 = scalar_lea.sflag [#allocation5], 1
  %2694 = vsyncmov %s2693
  %s2695 = vpop.sfrf %2694
  %p2696 = scmp.eq.s32.totalorder %s2695, 0
  %p2697 = pneg %p2696
  %2699 = shalt.err (%p2697)

</llo_original>
